<compile_context>
chip_gen: v5e
topology: v5e:2x2
jax: 0.10.0
libtpu: 0.0.40
codegen_flags: <defaults>
</compile_context>

<pallas_src>
import functools

import numpy as np
import jax
import jax.numpy as jnp
from jax import lax
from jax.experimental import pallas as pl
from jax.experimental.pallas import tpu as pltpu

NEG_INF = float("-inf")   # Python float: never a captured jax-array constant
BB = 8                    # batch items per grid step (packed into sublanes)
LANES = 128               # lane width of the (lane-dense) loss output
UNROLL_T = 16             # T at or below this: keep emissions in vregs + unroll


def _logsumexp3(a, b, c):
    m = jnp.maximum(jnp.maximum(a, b), c)
    m_safe = jnp.where(m == NEG_INF, 0.0, m)
    s = jnp.exp(a - m_safe) + jnp.exp(b - m_safe) + jnp.exp(c - m_safe)
    return m_safe + jnp.log(s)


def _ctc_kernel(x_ref, ext_ref, ilen_ref, tlen_ref,    # VMEM inputs
                out_ref,                               # VMEM output (BB, LANES)
                *scratch,                              # optional (T, BB, Lp) slab
                blank):
    T = x_ref.shape[1]
    Cp = x_ref.shape[2]          # padded class count (multiple of 128)
    Lp = ext_ref.shape[1]        # padded extended-label width (multiple of 128)

    # ---- emission gather on the MXU: em[t, b, s] = lp[b, t, ext[b, s]] ----
    # One-hot built in-kernel from int32 extended labels; one lane-dense
    # (T, Cp) x (Cp, Lp) matmul per sample.
    iota_c = lax.broadcasted_iota(jnp.int32, (Cp, Lp), 0)
    res = []                                            # list of (T, Lp) values
    for b in range(BB):                                 # static unroll
        onehot_b = (iota_c == ext_ref[pl.ds(b, 1), :]).astype(jnp.float32)
        res.append(jnp.dot(x_ref[b], onehot_b,
                           preferred_element_type=jnp.float32))

    # ---- re-layout to time-major so the DP loop reads one tile per step ----
    sub2 = lax.broadcasted_iota(jnp.int32, (BB, Lp), 0)
    row_masks = [sub2 == b for b in range(1, BB)]       # hoisted masks

    def compose_row(t):                                 # static t -> (BB, Lp)
        row = jnp.broadcast_to(res[0][t:t + 1, :], (BB, Lp))
        for b in range(1, BB):
            row = jnp.where(row_masks[b - 1], res[b][t:t + 1, :], row)
        return row

    if scratch:
        # Large-T path: time-major slab in VMEM scratch, fori_loop DP.
        # TODO(synk): for very long T this should tile the matmul/compose over
        # T (res values become register-heavy); not needed at these shapes.
        em_ref = scratch[0]
        sub3 = lax.broadcasted_iota(jnp.int32, (T, BB, Lp), 1)
        slab = jnp.broadcast_to(res[0][:, None, :], (T, BB, Lp))
        for b in range(1, BB):
            slab = jnp.where(sub3 == b, res[b][:, None, :], slab)
        em_ref[...] = slab
        em0 = em_ref[0]
    else:
        # Small-T path: keep all rows in vregs (no VMEM round-trip).
        rows = [compose_row(t) for t in range(T)]
        em0 = rows[0]

    # ---- hoisted, loop-invariant masks / additive -inf guards ----
    s_idx = lax.broadcasted_iota(jnp.int32, (1, Lp), 1)  # (1, Lp)
    ext_v = ext_ref[...]                                 # (BB, Lp) int32
    T_b = ilen_ref[...]                                  # (BB, 1)  int32
    S_b = tlen_ref[...]                                  # (BB, 1)  int32
    L_b = 2 * S_b + 1                                    # (BB, 1)

    valid_add = jnp.where(s_idx < L_b, 0.0, NEG_INF)     # keep padded s dead
    sh1_add = jnp.where(s_idx >= 1, 0.0, NEG_INF)        # kill roll wrap at s=0
    skip_ok = ((s_idx >= 2) & (ext_v != blank)
               & (ext_v != pltpu.roll(ext_v, shift=2, axis=1)))
    sh2_add = jnp.where(skip_ok, 0.0, NEG_INF)           # legal s-2 transitions

    # init: alpha[0] = em[0, blank]; alpha[1] = em[0, target_0] (only if S_b > 0)
    alpha0 = jnp.where(s_idx < jnp.minimum(L_b, 2), em0, NEG_INF)

    def step(em_t, t, alpha):
        sh1 = pltpu.roll(alpha, shift=1, axis=1) + sh1_add
        sh2 = pltpu.roll(alpha, shift=2, axis=1) + sh2_add
        new = em_t + _logsumexp3(alpha, sh1, sh2) + valid_add
        return jnp.where(t < T_b, new, alpha)            # freeze finished rows

    if scratch:
        alpha = lax.fori_loop(1, T, lambda t, a: step(em_ref[t], t, a), alpha0)
    else:
        alpha = alpha0
        for t in range(1, T):                            # fully unrolled
            alpha = step(rows[t], t, alpha)

    # ---- readout: loglik = LSE(alpha[L_b-1], alpha[L_b-2]) per sample ----
    v1 = jnp.max(jnp.where(s_idx == L_b - 1, alpha, NEG_INF), axis=1, keepdims=True)
    v2 = jnp.max(jnp.where(s_idx == L_b - 2, alpha, NEG_INF), axis=1, keepdims=True)
    m = jnp.maximum(v1, v2)
    m_safe = jnp.where(m == NEG_INF, 0.0, m)
    log_lik = m_safe + jnp.log(jnp.exp(v1 - m_safe) + jnp.exp(v2 - m_safe))
    # reduction='mean': per-sample loss divided by clamp_min(target_length, 1)
    loss = -log_lik / jnp.maximum(S_b, 1).astype(jnp.float32)      # (BB, 1)
    out_ref[...] = jnp.broadcast_to(loss, (BB, LANES))   # lane-dense, unmasked vst


def ctc_loss_pallas(log_probs_tnc, targets, input_lengths, target_lengths, blank=0):
    T, N, C = log_probs_tnc.shape
    S = targets.shape[1]
    L = 2 * S + 1
    Lp = max(128, ((L + 127) // 128) * 128)        # lane-dense extended-label width
    Cp = max(128, ((C + 127) // 128) * 128)        # lane-aligned class dim for MXU
    N_pad = ((N + BB - 1) // BB) * BB
    nblk = N_pad // BB

    # batch-major layout + padding (padded items: ilen=1, tlen=0, zero log-probs)
    x = jnp.transpose(log_probs_tnc, (1, 0, 2)).astype(jnp.float32)   # (N, T, C)
    x = jnp.pad(x, ((0, N_pad - N), (0, 0), (0, Cp - C)))
    tgt = jnp.pad(targets.astype(jnp.int32), ((0, N_pad - N), (0, 0)))
    ilen = jnp.pad(input_lengths.astype(jnp.int32), (0, N_pad - N), constant_values=1)
    tlen = jnp.pad(target_lengths.astype(jnp.int32), (0, N_pad - N), constant_values=0)

    # blank-extended labels, padded to Lp with `blank` (cheap int32 glue)
    ext = jnp.full((N_pad, Lp), blank, jnp.int32)
    if S > 0:
        ext = ext.at[:, 1:2 * S:2].set(tgt)

    # Small static T: no VMEM emission slab (rows live in vregs, unrolled DP).
    scratch_shapes = []
    if T > UNROLL_T:
        scratch_shapes = [pltpu.VMEM((T, BB, Lp), jnp.float32)]

    grid_spec = pltpu.PrefetchScalarGridSpec(
        num_scalar_prefetch=0,
        grid=(nblk,),
        in_specs=[
            pl.BlockSpec((BB, T, Cp), lambda b: (b, 0, 0)),   # log-probs
            pl.BlockSpec((BB, Lp), lambda b: (b, 0)),         # extended labels
            pl.BlockSpec((BB, 1), lambda b: (b, 0)),          # input lengths
            pl.BlockSpec((BB, 1), lambda b: (b, 0)),          # target lengths
        ],
        out_specs=pl.BlockSpec((BB, LANES), lambda b: (b, 0)),
        scratch_shapes=scratch_shapes,
    )
    out = pl.pallas_call(
        functools.partial(_ctc_kernel, blank=blank),
        out_shape=jax.ShapeDtypeStruct((N_pad, LANES), jnp.float32),
        grid_spec=grid_spec,
        compiler_params=pltpu.CompilerParams(dimension_semantics=("parallel",)),
    )(x, ext, ilen.reshape(N_pad, 1), tlen.reshape(N_pad, 1))

    per_sample = out[:N, 0]
    return jnp.mean(per_sample)                    # reduction='mean'


def _ctc_ref_numpy(log_probs, targets, in_lens, tgt_lens, blank=0):
    """Plain numpy CTC forward (same semantics as torch.nn.CTCLoss, mean reduction)."""
    T, N, C = log_probs.shape
    neg = -np.inf
    losses = []
    for b in range(N):
        Tb, Sb = int(in_lens[b]), int(tgt_lens[b])
        tgt = [int(v) for v in targets[b, :Sb]]
        ext = [blank]
        for c in tgt:
            ext += [c, blank]
        L = len(ext)
        alpha = np.full(L, neg)
        alpha[0] = log_probs[0, b, blank]
        if L > 1:
            alpha[1] = log_probs[0, b, ext[1]]
        for t in range(1, Tb):
            new = np.full(L, neg)
            for s in range(L):
                cands = [alpha[s]]
                if s >= 1:
                    cands.append(alpha[s - 1])
                if s >= 2 and ext[s] != blank and ext[s] != ext[s - 2]:
                    cands.append(alpha[s - 2])
                m = max(cands)
                if m != neg:
                    new[s] = log_probs[t, b, ext[s]] + m + np.log(
                        sum(np.exp(c - m) for c in cands))
            alpha = new
        cands = [alpha[L - 1]] + ([alpha[L - 2]] if L >= 2 else [])
        m = max(cands)
        ll = neg if m == neg else m + np.log(sum(np.exp(c - m) for c in cands))
        losses.append(-ll / max(Sb, 1))
    return float(np.mean(losses))


if __name__ == "__main__":
    T, N, C, S = 8, 4, 6, 3
    key = jax.random.PRNGKey(0)
    k1, k2 = jax.random.split(key)

    logits = jax.random.normal(k1, (T, N, C), jnp.float32)
    log_probs = jax.nn.log_softmax(logits, axis=-1)          # (T, N, C), CTC input
    targets = jax.random.randint(k2, (N, S), 1, C)           # non-blank labels, (N, S)
    input_lengths = jnp.array([8, 8, 7, 8], jnp.int32)
    # includes a zero-size target, per the "CTCLoss_zero_size" case name
    target_lengths = jnp.array([3, 2, 0, 3], jnp.int32)

    out = ctc_loss_pallas(log_probs, targets, input_lengths, target_lengths)
    out = jax.block_until_ready(out)

    ref = _ctc_ref_numpy(np.asarray(log_probs), np.asarray(targets),
                         np.asarray(input_lengths), np.asarray(target_lengths))
    np.testing.assert_allclose(float(out), ref, rtol=1e-4, atol=1e-4)
    print("KERNEL_OK")
</pallas_src>

<mosaic_0001>
module attributes {stable_mosaic.version = 11 : i64} {
  func.func @_ctc_kernel(%arg0: i32, %arg1: memref<8x8x128xf32, #tpu.memory_space<vmem>>, %arg2: memref<8x128xi32, #tpu.memory_space<vmem>>, %arg3: memref<8x1xi32, #tpu.memory_space<vmem>>, %arg4: memref<8x1xi32, #tpu.memory_space<vmem>>, %arg5: memref<8x128xf32, #tpu.memory_space<vmem>>) attributes {dimension_semantics = [#tpu.dimension_semantics<parallel>], iteration_bounds = array<i64: 1>, scalar_prefetch = 0 : i64, scratch_operands = 0 : i64, tpu.core_type = #tpu.core_type<tc>, window_params = [{transform_indices = @transform_0, window_bounds = array<i64: 8, 8, 128>}, {transform_indices = @transform_1, window_bounds = array<i64: 8, 128>}, {transform_indices = @transform_2, window_bounds = array<i64: 8, 1>}, {transform_indices = @transform_3, window_bounds = array<i64: 8, 1>}, {transform_indices = @transform_4, window_bounds = array<i64: 8, 128>}]} {
    %0 = tpu.iota {dimensions = array<i32: 0>} : vector<128x128xi32>
    %c0 = arith.constant 0 : index
    %c0_0 = arith.constant 0 : index
    %1 = vector.load %arg2[%c0, %c0_0] : memref<8x128xi32, #tpu.memory_space<vmem>>, vector<1x128xi32>
    %2 = vector.broadcast %1 : vector<1x128xi32> to vector<128x128xi32>
    %3 = arith.cmpi eq, %0, %2 : vector<128x128xi32>
    %4 = arith.extui %3 : vector<128x128xi1> to vector<128x128xi32>
    %5 = arith.sitofp %4 : vector<128x128xi32> to vector<128x128xf32>
    %c0_1 = arith.constant 0 : index
    %c0_2 = arith.constant 0 : index
    %c0_3 = arith.constant 0 : index
    %6 = vector.load %arg1[%c0_1, %c0_2, %c0_3] : memref<8x8x128xf32, #tpu.memory_space<vmem>>, vector<1x8x128xf32>
    %7 = vector.shape_cast %6 : vector<1x8x128xf32> to vector<8x128xf32>
    %cst = arith.constant dense<0.000000e+00> : vector<8x128xf32>
    %8 = tpu.matmul %7, %5, %cst {dimension_numbers = #tpu.dot_dimension_numbers<[1], [0], [0], [1], [0, 0, 1, 1], [], []>} : vector<8x128xf32>, vector<128x128xf32>, vector<8x128xf32> -> vector<8x128xf32>
    %c1 = arith.constant 1 : index
    %c0_4 = arith.constant 0 : index
    %9 = vector.load %arg2[%c1, %c0_4] : memref<8x128xi32, #tpu.memory_space<vmem>>, vector<1x128xi32>
    %10 = vector.broadcast %9 : vector<1x128xi32> to vector<128x128xi32>
    %11 = arith.cmpi eq, %0, %10 : vector<128x128xi32>
    %12 = arith.extui %11 : vector<128x128xi1> to vector<128x128xi32>
    %13 = arith.sitofp %12 : vector<128x128xi32> to vector<128x128xf32>
    %c1_5 = arith.constant 1 : index
    %c0_6 = arith.constant 0 : index
    %c0_7 = arith.constant 0 : index
    %14 = vector.load %arg1[%c1_5, %c0_6, %c0_7] : memref<8x8x128xf32, #tpu.memory_space<vmem>>, vector<1x8x128xf32>
    %15 = vector.shape_cast %14 : vector<1x8x128xf32> to vector<8x128xf32>
    %cst_8 = arith.constant dense<0.000000e+00> : vector<8x128xf32>
    %16 = tpu.matmul %15, %13, %cst_8 {dimension_numbers = #tpu.dot_dimension_numbers<[1], [0], [0], [1], [0, 0, 1, 1], [], []>} : vector<8x128xf32>, vector<128x128xf32>, vector<8x128xf32> -> vector<8x128xf32>
    %c2 = arith.constant 2 : index
    %c0_9 = arith.constant 0 : index
    %17 = vector.load %arg2[%c2, %c0_9] : memref<8x128xi32, #tpu.memory_space<vmem>>, vector<1x128xi32>
    %18 = vector.broadcast %17 : vector<1x128xi32> to vector<128x128xi32>
    %19 = arith.cmpi eq, %0, %18 : vector<128x128xi32>
    %20 = arith.extui %19 : vector<128x128xi1> to vector<128x128xi32>
    %21 = arith.sitofp %20 : vector<128x128xi32> to vector<128x128xf32>
    %c2_10 = arith.constant 2 : index
    %c0_11 = arith.constant 0 : index
    %c0_12 = arith.constant 0 : index
    %22 = vector.load %arg1[%c2_10, %c0_11, %c0_12] : memref<8x8x128xf32, #tpu.memory_space<vmem>>, vector<1x8x128xf32>
    %23 = vector.shape_cast %22 : vector<1x8x128xf32> to vector<8x128xf32>
    %cst_13 = arith.constant dense<0.000000e+00> : vector<8x128xf32>
    %24 = tpu.matmul %23, %21, %cst_13 {dimension_numbers = #tpu.dot_dimension_numbers<[1], [0], [0], [1], [0, 0, 1, 1], [], []>} : vector<8x128xf32>, vector<128x128xf32>, vector<8x128xf32> -> vector<8x128xf32>
    %c3 = arith.constant 3 : index
    %c0_14 = arith.constant 0 : index
    %25 = vector.load %arg2[%c3, %c0_14] : memref<8x128xi32, #tpu.memory_space<vmem>>, vector<1x128xi32>
    %26 = vector.broadcast %25 : vector<1x128xi32> to vector<128x128xi32>
    %27 = arith.cmpi eq, %0, %26 : vector<128x128xi32>
    %28 = arith.extui %27 : vector<128x128xi1> to vector<128x128xi32>
    %29 = arith.sitofp %28 : vector<128x128xi32> to vector<128x128xf32>
    %c3_15 = arith.constant 3 : index
    %c0_16 = arith.constant 0 : index
    %c0_17 = arith.constant 0 : index
    %30 = vector.load %arg1[%c3_15, %c0_16, %c0_17] : memref<8x8x128xf32, #tpu.memory_space<vmem>>, vector<1x8x128xf32>
    %31 = vector.shape_cast %30 : vector<1x8x128xf32> to vector<8x128xf32>
    %cst_18 = arith.constant dense<0.000000e+00> : vector<8x128xf32>
    %32 = tpu.matmul %31, %29, %cst_18 {dimension_numbers = #tpu.dot_dimension_numbers<[1], [0], [0], [1], [0, 0, 1, 1], [], []>} : vector<8x128xf32>, vector<128x128xf32>, vector<8x128xf32> -> vector<8x128xf32>
    %c4 = arith.constant 4 : index
    %c0_19 = arith.constant 0 : index
    %33 = vector.load %arg2[%c4, %c0_19] : memref<8x128xi32, #tpu.memory_space<vmem>>, vector<1x128xi32>
    %34 = vector.broadcast %33 : vector<1x128xi32> to vector<128x128xi32>
    %35 = arith.cmpi eq, %0, %34 : vector<128x128xi32>
    %36 = arith.extui %35 : vector<128x128xi1> to vector<128x128xi32>
    %37 = arith.sitofp %36 : vector<128x128xi32> to vector<128x128xf32>
    %c4_20 = arith.constant 4 : index
    %c0_21 = arith.constant 0 : index
    %c0_22 = arith.constant 0 : index
    %38 = vector.load %arg1[%c4_20, %c0_21, %c0_22] : memref<8x8x128xf32, #tpu.memory_space<vmem>>, vector<1x8x128xf32>
    %39 = vector.shape_cast %38 : vector<1x8x128xf32> to vector<8x128xf32>
    %cst_23 = arith.constant dense<0.000000e+00> : vector<8x128xf32>
    %40 = tpu.matmul %39, %37, %cst_23 {dimension_numbers = #tpu.dot_dimension_numbers<[1], [0], [0], [1], [0, 0, 1, 1], [], []>} : vector<8x128xf32>, vector<128x128xf32>, vector<8x128xf32> -> vector<8x128xf32>
    %c5 = arith.constant 5 : index
    %c0_24 = arith.constant 0 : index
    %41 = vector.load %arg2[%c5, %c0_24] : memref<8x128xi32, #tpu.memory_space<vmem>>, vector<1x128xi32>
    %42 = vector.broadcast %41 : vector<1x128xi32> to vector<128x128xi32>
    %43 = arith.cmpi eq, %0, %42 : vector<128x128xi32>
    %44 = arith.extui %43 : vector<128x128xi1> to vector<128x128xi32>
    %45 = arith.sitofp %44 : vector<128x128xi32> to vector<128x128xf32>
    %c5_25 = arith.constant 5 : index
    %c0_26 = arith.constant 0 : index
    %c0_27 = arith.constant 0 : index
    %46 = vector.load %arg1[%c5_25, %c0_26, %c0_27] : memref<8x8x128xf32, #tpu.memory_space<vmem>>, vector<1x8x128xf32>
    %47 = vector.shape_cast %46 : vector<1x8x128xf32> to vector<8x128xf32>
    %cst_28 = arith.constant dense<0.000000e+00> : vector<8x128xf32>
    %48 = tpu.matmul %47, %45, %cst_28 {dimension_numbers = #tpu.dot_dimension_numbers<[1], [0], [0], [1], [0, 0, 1, 1], [], []>} : vector<8x128xf32>, vector<128x128xf32>, vector<8x128xf32> -> vector<8x128xf32>
    %c6 = arith.constant 6 : index
    %c0_29 = arith.constant 0 : index
    %49 = vector.load %arg2[%c6, %c0_29] : memref<8x128xi32, #tpu.memory_space<vmem>>, vector<1x128xi32>
    %50 = vector.broadcast %49 : vector<1x128xi32> to vector<128x128xi32>
    %51 = arith.cmpi eq, %0, %50 : vector<128x128xi32>
    %52 = arith.extui %51 : vector<128x128xi1> to vector<128x128xi32>
    %53 = arith.sitofp %52 : vector<128x128xi32> to vector<128x128xf32>
    %c6_30 = arith.constant 6 : index
    %c0_31 = arith.constant 0 : index
    %c0_32 = arith.constant 0 : index
    %54 = vector.load %arg1[%c6_30, %c0_31, %c0_32] : memref<8x8x128xf32, #tpu.memory_space<vmem>>, vector<1x8x128xf32>
    %55 = vector.shape_cast %54 : vector<1x8x128xf32> to vector<8x128xf32>
    %cst_33 = arith.constant dense<0.000000e+00> : vector<8x128xf32>
    %56 = tpu.matmul %55, %53, %cst_33 {dimension_numbers = #tpu.dot_dimension_numbers<[1], [0], [0], [1], [0, 0, 1, 1], [], []>} : vector<8x128xf32>, vector<128x128xf32>, vector<8x128xf32> -> vector<8x128xf32>
    %c7 = arith.constant 7 : index
    %c0_34 = arith.constant 0 : index
    %57 = vector.load %arg2[%c7, %c0_34] : memref<8x128xi32, #tpu.memory_space<vmem>>, vector<1x128xi32>
    %58 = vector.broadcast %57 : vector<1x128xi32> to vector<128x128xi32>
    %59 = arith.cmpi eq, %0, %58 : vector<128x128xi32>
    %60 = arith.extui %59 : vector<128x128xi1> to vector<128x128xi32>
    %61 = arith.sitofp %60 : vector<128x128xi32> to vector<128x128xf32>
    %c7_35 = arith.constant 7 : index
    %c0_36 = arith.constant 0 : index
    %c0_37 = arith.constant 0 : index
    %62 = vector.load %arg1[%c7_35, %c0_36, %c0_37] : memref<8x8x128xf32, #tpu.memory_space<vmem>>, vector<1x8x128xf32>
    %63 = vector.shape_cast %62 : vector<1x8x128xf32> to vector<8x128xf32>
    %cst_38 = arith.constant dense<0.000000e+00> : vector<8x128xf32>
    %64 = tpu.matmul %63, %61, %cst_38 {dimension_numbers = #tpu.dot_dimension_numbers<[1], [0], [0], [1], [0, 0, 1, 1], [], []>} : vector<8x128xf32>, vector<128x128xf32>, vector<8x128xf32> -> vector<8x128xf32>
    %65 = tpu.iota {dimensions = array<i32: 0>} : vector<8x128xi32>
    %c1_i32 = arith.constant 1 : i32
    %66 = vector.broadcast %c1_i32 : i32 to vector<8x128xi32>
    %67 = arith.cmpi eq, %65, %66 : vector<8x128xi32>
    %c2_i32 = arith.constant 2 : i32
    %68 = vector.broadcast %c2_i32 : i32 to vector<8x128xi32>
    %69 = arith.cmpi eq, %65, %68 : vector<8x128xi32>
    %c3_i32 = arith.constant 3 : i32
    %70 = vector.broadcast %c3_i32 : i32 to vector<8x128xi32>
    %71 = arith.cmpi eq, %65, %70 : vector<8x128xi32>
    %c4_i32 = arith.constant 4 : i32
    %72 = vector.broadcast %c4_i32 : i32 to vector<8x128xi32>
    %73 = arith.cmpi eq, %65, %72 : vector<8x128xi32>
    %c5_i32 = arith.constant 5 : i32
    %74 = vector.broadcast %c5_i32 : i32 to vector<8x128xi32>
    %75 = arith.cmpi eq, %65, %74 : vector<8x128xi32>
    %c6_i32 = arith.constant 6 : i32
    %76 = vector.broadcast %c6_i32 : i32 to vector<8x128xi32>
    %77 = arith.cmpi eq, %65, %76 : vector<8x128xi32>
    %c7_i32 = arith.constant 7 : i32
    %78 = vector.broadcast %c7_i32 : i32 to vector<8x128xi32>
    %79 = arith.cmpi eq, %65, %78 : vector<8x128xi32>
    %80 = vector.extract_strided_slice %8 {offsets = [0, 0], sizes = [1, 128], strides = [1, 1]} : vector<8x128xf32> to vector<1x128xf32>
    %81 = vector.shape_cast %80 : vector<1x128xf32> to vector<1x128xf32>
    %82 = vector.broadcast %81 : vector<1x128xf32> to vector<8x128xf32>
    %83 = vector.extract_strided_slice %16 {offsets = [0, 0], sizes = [1, 128], strides = [1, 1]} : vector<8x128xf32> to vector<1x128xf32>
    %84 = vector.shape_cast %83 : vector<1x128xf32> to vector<1x128xf32>
    %85 = vector.broadcast %84 : vector<1x128xf32> to vector<8x128xf32>
    %86 = arith.select %67, %85, %82 : vector<8x128xi1>, vector<8x128xf32>
    %87 = vector.extract_strided_slice %24 {offsets = [0, 0], sizes = [1, 128], strides = [1, 1]} : vector<8x128xf32> to vector<1x128xf32>
    %88 = vector.shape_cast %87 : vector<1x128xf32> to vector<1x128xf32>
    %89 = vector.broadcast %88 : vector<1x128xf32> to vector<8x128xf32>
    %90 = arith.select %69, %89, %86 : vector<8x128xi1>, vector<8x128xf32>
    %91 = vector.extract_strided_slice %32 {offsets = [0, 0], sizes = [1, 128], strides = [1, 1]} : vector<8x128xf32> to vector<1x128xf32>
    %92 = vector.shape_cast %91 : vector<1x128xf32> to vector<1x128xf32>
    %93 = vector.broadcast %92 : vector<1x128xf32> to vector<8x128xf32>
    %94 = arith.select %71, %93, %90 : vector<8x128xi1>, vector<8x128xf32>
    %95 = vector.extract_strided_slice %40 {offsets = [0, 0], sizes = [1, 128], strides = [1, 1]} : vector<8x128xf32> to vector<1x128xf32>
    %96 = vector.shape_cast %95 : vector<1x128xf32> to vector<1x128xf32>
    %97 = vector.broadcast %96 : vector<1x128xf32> to vector<8x128xf32>
    %98 = arith.select %73, %97, %94 : vector<8x128xi1>, vector<8x128xf32>
    %99 = vector.extract_strided_slice %48 {offsets = [0, 0], sizes = [1, 128], strides = [1, 1]} : vector<8x128xf32> to vector<1x128xf32>
    %100 = vector.shape_cast %99 : vector<1x128xf32> to vector<1x128xf32>
    %101 = vector.broadcast %100 : vector<1x128xf32> to vector<8x128xf32>
    %102 = arith.select %75, %101, %98 : vector<8x128xi1>, vector<8x128xf32>
    %103 = vector.extract_strided_slice %56 {offsets = [0, 0], sizes = [1, 128], strides = [1, 1]} : vector<8x128xf32> to vector<1x128xf32>
    %104 = vector.shape_cast %103 : vector<1x128xf32> to vector<1x128xf32>
    %105 = vector.broadcast %104 : vector<1x128xf32> to vector<8x128xf32>
    %106 = arith.select %77, %105, %102 : vector<8x128xi1>, vector<8x128xf32>
    %107 = vector.extract_strided_slice %64 {offsets = [0, 0], sizes = [1, 128], strides = [1, 1]} : vector<8x128xf32> to vector<1x128xf32>
    %108 = vector.shape_cast %107 : vector<1x128xf32> to vector<1x128xf32>
    %109 = vector.broadcast %108 : vector<1x128xf32> to vector<8x128xf32>
    %110 = arith.select %79, %109, %106 : vector<8x128xi1>, vector<8x128xf32>
    %111 = vector.extract_strided_slice %8 {offsets = [1, 0], sizes = [1, 128], strides = [1, 1]} : vector<8x128xf32> to vector<1x128xf32>
    %112 = vector.shape_cast %111 : vector<1x128xf32> to vector<1x128xf32>
    %113 = vector.broadcast %112 : vector<1x128xf32> to vector<8x128xf32>
    %114 = vector.extract_strided_slice %16 {offsets = [1, 0], sizes = [1, 128], strides = [1, 1]} : vector<8x128xf32> to vector<1x128xf32>
    %115 = vector.shape_cast %114 : vector<1x128xf32> to vector<1x128xf32>
    %116 = vector.broadcast %115 : vector<1x128xf32> to vector<8x128xf32>
    %117 = arith.select %67, %116, %113 : vector<8x128xi1>, vector<8x128xf32>
    %118 = vector.extract_strided_slice %24 {offsets = [1, 0], sizes = [1, 128], strides = [1, 1]} : vector<8x128xf32> to vector<1x128xf32>
    %119 = vector.shape_cast %118 : vector<1x128xf32> to vector<1x128xf32>
    %120 = vector.broadcast %119 : vector<1x128xf32> to vector<8x128xf32>
    %121 = arith.select %69, %120, %117 : vector<8x128xi1>, vector<8x128xf32>
    %122 = vector.extract_strided_slice %32 {offsets = [1, 0], sizes = [1, 128], strides = [1, 1]} : vector<8x128xf32> to vector<1x128xf32>
    %123 = vector.shape_cast %122 : vector<1x128xf32> to vector<1x128xf32>
    %124 = vector.broadcast %123 : vector<1x128xf32> to vector<8x128xf32>
    %125 = arith.select %71, %124, %121 : vector<8x128xi1>, vector<8x128xf32>
    %126 = vector.extract_strided_slice %40 {offsets = [1, 0], sizes = [1, 128], strides = [1, 1]} : vector<8x128xf32> to vector<1x128xf32>
    %127 = vector.shape_cast %126 : vector<1x128xf32> to vector<1x128xf32>
    %128 = vector.broadcast %127 : vector<1x128xf32> to vector<8x128xf32>
    %129 = arith.select %73, %128, %125 : vector<8x128xi1>, vector<8x128xf32>
    %130 = vector.extract_strided_slice %48 {offsets = [1, 0], sizes = [1, 128], strides = [1, 1]} : vector<8x128xf32> to vector<1x128xf32>
    %131 = vector.shape_cast %130 : vector<1x128xf32> to vector<1x128xf32>
    %132 = vector.broadcast %131 : vector<1x128xf32> to vector<8x128xf32>
    %133 = arith.select %75, %132, %129 : vector<8x128xi1>, vector<8x128xf32>
    %134 = vector.extract_strided_slice %56 {offsets = [1, 0], sizes = [1, 128], strides = [1, 1]} : vector<8x128xf32> to vector<1x128xf32>
    %135 = vector.shape_cast %134 : vector<1x128xf32> to vector<1x128xf32>
    %136 = vector.broadcast %135 : vector<1x128xf32> to vector<8x128xf32>
    %137 = arith.select %77, %136, %133 : vector<8x128xi1>, vector<8x128xf32>
    %138 = vector.extract_strided_slice %64 {offsets = [1, 0], sizes = [1, 128], strides = [1, 1]} : vector<8x128xf32> to vector<1x128xf32>
    %139 = vector.shape_cast %138 : vector<1x128xf32> to vector<1x128xf32>
    %140 = vector.broadcast %139 : vector<1x128xf32> to vector<8x128xf32>
    %141 = arith.select %79, %140, %137 : vector<8x128xi1>, vector<8x128xf32>
    %142 = vector.extract_strided_slice %8 {offsets = [2, 0], sizes = [1, 128], strides = [1, 1]} : vector<8x128xf32> to vector<1x128xf32>
    %143 = vector.shape_cast %142 : vector<1x128xf32> to vector<1x128xf32>
    %144 = vector.broadcast %143 : vector<1x128xf32> to vector<8x128xf32>
    %145 = vector.extract_strided_slice %16 {offsets = [2, 0], sizes = [1, 128], strides = [1, 1]} : vector<8x128xf32> to vector<1x128xf32>
    %146 = vector.shape_cast %145 : vector<1x128xf32> to vector<1x128xf32>
    %147 = vector.broadcast %146 : vector<1x128xf32> to vector<8x128xf32>
    %148 = arith.select %67, %147, %144 : vector<8x128xi1>, vector<8x128xf32>
    %149 = vector.extract_strided_slice %24 {offsets = [2, 0], sizes = [1, 128], strides = [1, 1]} : vector<8x128xf32> to vector<1x128xf32>
    %150 = vector.shape_cast %149 : vector<1x128xf32> to vector<1x128xf32>
    %151 = vector.broadcast %150 : vector<1x128xf32> to vector<8x128xf32>
    %152 = arith.select %69, %151, %148 : vector<8x128xi1>, vector<8x128xf32>
    %153 = vector.extract_strided_slice %32 {offsets = [2, 0], sizes = [1, 128], strides = [1, 1]} : vector<8x128xf32> to vector<1x128xf32>
    %154 = vector.shape_cast %153 : vector<1x128xf32> to vector<1x128xf32>
    %155 = vector.broadcast %154 : vector<1x128xf32> to vector<8x128xf32>
    %156 = arith.select %71, %155, %152 : vector<8x128xi1>, vector<8x128xf32>
    %157 = vector.extract_strided_slice %40 {offsets = [2, 0], sizes = [1, 128], strides = [1, 1]} : vector<8x128xf32> to vector<1x128xf32>
    %158 = vector.shape_cast %157 : vector<1x128xf32> to vector<1x128xf32>
    %159 = vector.broadcast %158 : vector<1x128xf32> to vector<8x128xf32>
    %160 = arith.select %73, %159, %156 : vector<8x128xi1>, vector<8x128xf32>
    %161 = vector.extract_strided_slice %48 {offsets = [2, 0], sizes = [1, 128], strides = [1, 1]} : vector<8x128xf32> to vector<1x128xf32>
    %162 = vector.shape_cast %161 : vector<1x128xf32> to vector<1x128xf32>
    %163 = vector.broadcast %162 : vector<1x128xf32> to vector<8x128xf32>
    %164 = arith.select %75, %163, %160 : vector<8x128xi1>, vector<8x128xf32>
    %165 = vector.extract_strided_slice %56 {offsets = [2, 0], sizes = [1, 128], strides = [1, 1]} : vector<8x128xf32> to vector<1x128xf32>
    %166 = vector.shape_cast %165 : vector<1x128xf32> to vector<1x128xf32>
    %167 = vector.broadcast %166 : vector<1x128xf32> to vector<8x128xf32>
    %168 = arith.select %77, %167, %164 : vector<8x128xi1>, vector<8x128xf32>
    %169 = vector.extract_strided_slice %64 {offsets = [2, 0], sizes = [1, 128], strides = [1, 1]} : vector<8x128xf32> to vector<1x128xf32>
    %170 = vector.shape_cast %169 : vector<1x128xf32> to vector<1x128xf32>
    %171 = vector.broadcast %170 : vector<1x128xf32> to vector<8x128xf32>
    %172 = arith.select %79, %171, %168 : vector<8x128xi1>, vector<8x128xf32>
    %173 = vector.extract_strided_slice %8 {offsets = [3, 0], sizes = [1, 128], strides = [1, 1]} : vector<8x128xf32> to vector<1x128xf32>
    %174 = vector.shape_cast %173 : vector<1x128xf32> to vector<1x128xf32>
    %175 = vector.broadcast %174 : vector<1x128xf32> to vector<8x128xf32>
    %176 = vector.extract_strided_slice %16 {offsets = [3, 0], sizes = [1, 128], strides = [1, 1]} : vector<8x128xf32> to vector<1x128xf32>
    %177 = vector.shape_cast %176 : vector<1x128xf32> to vector<1x128xf32>
    %178 = vector.broadcast %177 : vector<1x128xf32> to vector<8x128xf32>
    %179 = arith.select %67, %178, %175 : vector<8x128xi1>, vector<8x128xf32>
    %180 = vector.extract_strided_slice %24 {offsets = [3, 0], sizes = [1, 128], strides = [1, 1]} : vector<8x128xf32> to vector<1x128xf32>
    %181 = vector.shape_cast %180 : vector<1x128xf32> to vector<1x128xf32>
    %182 = vector.broadcast %181 : vector<1x128xf32> to vector<8x128xf32>
    %183 = arith.select %69, %182, %179 : vector<8x128xi1>, vector<8x128xf32>
    %184 = vector.extract_strided_slice %32 {offsets = [3, 0], sizes = [1, 128], strides = [1, 1]} : vector<8x128xf32> to vector<1x128xf32>
    %185 = vector.shape_cast %184 : vector<1x128xf32> to vector<1x128xf32>
    %186 = vector.broadcast %185 : vector<1x128xf32> to vector<8x128xf32>
    %187 = arith.select %71, %186, %183 : vector<8x128xi1>, vector<8x128xf32>
    %188 = vector.extract_strided_slice %40 {offsets = [3, 0], sizes = [1, 128], strides = [1, 1]} : vector<8x128xf32> to vector<1x128xf32>
    %189 = vector.shape_cast %188 : vector<1x128xf32> to vector<1x128xf32>
    %190 = vector.broadcast %189 : vector<1x128xf32> to vector<8x128xf32>
    %191 = arith.select %73, %190, %187 : vector<8x128xi1>, vector<8x128xf32>
    %192 = vector.extract_strided_slice %48 {offsets = [3, 0], sizes = [1, 128], strides = [1, 1]} : vector<8x128xf32> to vector<1x128xf32>
    %193 = vector.shape_cast %192 : vector<1x128xf32> to vector<1x128xf32>
    %194 = vector.broadcast %193 : vector<1x128xf32> to vector<8x128xf32>
    %195 = arith.select %75, %194, %191 : vector<8x128xi1>, vector<8x128xf32>
    %196 = vector.extract_strided_slice %56 {offsets = [3, 0], sizes = [1, 128], strides = [1, 1]} : vector<8x128xf32> to vector<1x128xf32>
    %197 = vector.shape_cast %196 : vector<1x128xf32> to vector<1x128xf32>
    %198 = vector.broadcast %197 : vector<1x128xf32> to vector<8x128xf32>
    %199 = arith.select %77, %198, %195 : vector<8x128xi1>, vector<8x128xf32>
    %200 = vector.extract_strided_slice %64 {offsets = [3, 0], sizes = [1, 128], strides = [1, 1]} : vector<8x128xf32> to vector<1x128xf32>
    %201 = vector.shape_cast %200 : vector<1x128xf32> to vector<1x128xf32>
    %202 = vector.broadcast %201 : vector<1x128xf32> to vector<8x128xf32>
    %203 = arith.select %79, %202, %199 : vector<8x128xi1>, vector<8x128xf32>
    %204 = vector.extract_strided_slice %8 {offsets = [4, 0], sizes = [1, 128], strides = [1, 1]} : vector<8x128xf32> to vector<1x128xf32>
    %205 = vector.shape_cast %204 : vector<1x128xf32> to vector<1x128xf32>
    %206 = vector.broadcast %205 : vector<1x128xf32> to vector<8x128xf32>
    %207 = vector.extract_strided_slice %16 {offsets = [4, 0], sizes = [1, 128], strides = [1, 1]} : vector<8x128xf32> to vector<1x128xf32>
    %208 = vector.shape_cast %207 : vector<1x128xf32> to vector<1x128xf32>
    %209 = vector.broadcast %208 : vector<1x128xf32> to vector<8x128xf32>
    %210 = arith.select %67, %209, %206 : vector<8x128xi1>, vector<8x128xf32>
    %211 = vector.extract_strided_slice %24 {offsets = [4, 0], sizes = [1, 128], strides = [1, 1]} : vector<8x128xf32> to vector<1x128xf32>
    %212 = vector.shape_cast %211 : vector<1x128xf32> to vector<1x128xf32>
    %213 = vector.broadcast %212 : vector<1x128xf32> to vector<8x128xf32>
    %214 = arith.select %69, %213, %210 : vector<8x128xi1>, vector<8x128xf32>
    %215 = vector.extract_strided_slice %32 {offsets = [4, 0], sizes = [1, 128], strides = [1, 1]} : vector<8x128xf32> to vector<1x128xf32>
    %216 = vector.shape_cast %215 : vector<1x128xf32> to vector<1x128xf32>
    %217 = vector.broadcast %216 : vector<1x128xf32> to vector<8x128xf32>
    %218 = arith.select %71, %217, %214 : vector<8x128xi1>, vector<8x128xf32>
    %219 = vector.extract_strided_slice %40 {offsets = [4, 0], sizes = [1, 128], strides = [1, 1]} : vector<8x128xf32> to vector<1x128xf32>
    %220 = vector.shape_cast %219 : vector<1x128xf32> to vector<1x128xf32>
    %221 = vector.broadcast %220 : vector<1x128xf32> to vector<8x128xf32>
    %222 = arith.select %73, %221, %218 : vector<8x128xi1>, vector<8x128xf32>
    %223 = vector.extract_strided_slice %48 {offsets = [4, 0], sizes = [1, 128], strides = [1, 1]} : vector<8x128xf32> to vector<1x128xf32>
    %224 = vector.shape_cast %223 : vector<1x128xf32> to vector<1x128xf32>
    %225 = vector.broadcast %224 : vector<1x128xf32> to vector<8x128xf32>
    %226 = arith.select %75, %225, %222 : vector<8x128xi1>, vector<8x128xf32>
    %227 = vector.extract_strided_slice %56 {offsets = [4, 0], sizes = [1, 128], strides = [1, 1]} : vector<8x128xf32> to vector<1x128xf32>
    %228 = vector.shape_cast %227 : vector<1x128xf32> to vector<1x128xf32>
    %229 = vector.broadcast %228 : vector<1x128xf32> to vector<8x128xf32>
    %230 = arith.select %77, %229, %226 : vector<8x128xi1>, vector<8x128xf32>
    %231 = vector.extract_strided_slice %64 {offsets = [4, 0], sizes = [1, 128], strides = [1, 1]} : vector<8x128xf32> to vector<1x128xf32>
    %232 = vector.shape_cast %231 : vector<1x128xf32> to vector<1x128xf32>
    %233 = vector.broadcast %232 : vector<1x128xf32> to vector<8x128xf32>
    %234 = arith.select %79, %233, %230 : vector<8x128xi1>, vector<8x128xf32>
    %235 = vector.extract_strided_slice %8 {offsets = [5, 0], sizes = [1, 128], strides = [1, 1]} : vector<8x128xf32> to vector<1x128xf32>
    %236 = vector.shape_cast %235 : vector<1x128xf32> to vector<1x128xf32>
    %237 = vector.broadcast %236 : vector<1x128xf32> to vector<8x128xf32>
    %238 = vector.extract_strided_slice %16 {offsets = [5, 0], sizes = [1, 128], strides = [1, 1]} : vector<8x128xf32> to vector<1x128xf32>
    %239 = vector.shape_cast %238 : vector<1x128xf32> to vector<1x128xf32>
    %240 = vector.broadcast %239 : vector<1x128xf32> to vector<8x128xf32>
    %241 = arith.select %67, %240, %237 : vector<8x128xi1>, vector<8x128xf32>
    %242 = vector.extract_strided_slice %24 {offsets = [5, 0], sizes = [1, 128], strides = [1, 1]} : vector<8x128xf32> to vector<1x128xf32>
    %243 = vector.shape_cast %242 : vector<1x128xf32> to vector<1x128xf32>
    %244 = vector.broadcast %243 : vector<1x128xf32> to vector<8x128xf32>
    %245 = arith.select %69, %244, %241 : vector<8x128xi1>, vector<8x128xf32>
    %246 = vector.extract_strided_slice %32 {offsets = [5, 0], sizes = [1, 128], strides = [1, 1]} : vector<8x128xf32> to vector<1x128xf32>
    %247 = vector.shape_cast %246 : vector<1x128xf32> to vector<1x128xf32>
    %248 = vector.broadcast %247 : vector<1x128xf32> to vector<8x128xf32>
    %249 = arith.select %71, %248, %245 : vector<8x128xi1>, vector<8x128xf32>
    %250 = vector.extract_strided_slice %40 {offsets = [5, 0], sizes = [1, 128], strides = [1, 1]} : vector<8x128xf32> to vector<1x128xf32>
    %251 = vector.shape_cast %250 : vector<1x128xf32> to vector<1x128xf32>
    %252 = vector.broadcast %251 : vector<1x128xf32> to vector<8x128xf32>
    %253 = arith.select %73, %252, %249 : vector<8x128xi1>, vector<8x128xf32>
    %254 = vector.extract_strided_slice %48 {offsets = [5, 0], sizes = [1, 128], strides = [1, 1]} : vector<8x128xf32> to vector<1x128xf32>
    %255 = vector.shape_cast %254 : vector<1x128xf32> to vector<1x128xf32>
    %256 = vector.broadcast %255 : vector<1x128xf32> to vector<8x128xf32>
    %257 = arith.select %75, %256, %253 : vector<8x128xi1>, vector<8x128xf32>
    %258 = vector.extract_strided_slice %56 {offsets = [5, 0], sizes = [1, 128], strides = [1, 1]} : vector<8x128xf32> to vector<1x128xf32>
    %259 = vector.shape_cast %258 : vector<1x128xf32> to vector<1x128xf32>
    %260 = vector.broadcast %259 : vector<1x128xf32> to vector<8x128xf32>
    %261 = arith.select %77, %260, %257 : vector<8x128xi1>, vector<8x128xf32>
    %262 = vector.extract_strided_slice %64 {offsets = [5, 0], sizes = [1, 128], strides = [1, 1]} : vector<8x128xf32> to vector<1x128xf32>
    %263 = vector.shape_cast %262 : vector<1x128xf32> to vector<1x128xf32>
    %264 = vector.broadcast %263 : vector<1x128xf32> to vector<8x128xf32>
    %265 = arith.select %79, %264, %261 : vector<8x128xi1>, vector<8x128xf32>
    %266 = vector.extract_strided_slice %8 {offsets = [6, 0], sizes = [1, 128], strides = [1, 1]} : vector<8x128xf32> to vector<1x128xf32>
    %267 = vector.shape_cast %266 : vector<1x128xf32> to vector<1x128xf32>
    %268 = vector.broadcast %267 : vector<1x128xf32> to vector<8x128xf32>
    %269 = vector.extract_strided_slice %16 {offsets = [6, 0], sizes = [1, 128], strides = [1, 1]} : vector<8x128xf32> to vector<1x128xf32>
    %270 = vector.shape_cast %269 : vector<1x128xf32> to vector<1x128xf32>
    %271 = vector.broadcast %270 : vector<1x128xf32> to vector<8x128xf32>
    %272 = arith.select %67, %271, %268 : vector<8x128xi1>, vector<8x128xf32>
    %273 = vector.extract_strided_slice %24 {offsets = [6, 0], sizes = [1, 128], strides = [1, 1]} : vector<8x128xf32> to vector<1x128xf32>
    %274 = vector.shape_cast %273 : vector<1x128xf32> to vector<1x128xf32>
    %275 = vector.broadcast %274 : vector<1x128xf32> to vector<8x128xf32>
    %276 = arith.select %69, %275, %272 : vector<8x128xi1>, vector<8x128xf32>
    %277 = vector.extract_strided_slice %32 {offsets = [6, 0], sizes = [1, 128], strides = [1, 1]} : vector<8x128xf32> to vector<1x128xf32>
    %278 = vector.shape_cast %277 : vector<1x128xf32> to vector<1x128xf32>
    %279 = vector.broadcast %278 : vector<1x128xf32> to vector<8x128xf32>
    %280 = arith.select %71, %279, %276 : vector<8x128xi1>, vector<8x128xf32>
    %281 = vector.extract_strided_slice %40 {offsets = [6, 0], sizes = [1, 128], strides = [1, 1]} : vector<8x128xf32> to vector<1x128xf32>
    %282 = vector.shape_cast %281 : vector<1x128xf32> to vector<1x128xf32>
    %283 = vector.broadcast %282 : vector<1x128xf32> to vector<8x128xf32>
    %284 = arith.select %73, %283, %280 : vector<8x128xi1>, vector<8x128xf32>
    %285 = vector.extract_strided_slice %48 {offsets = [6, 0], sizes = [1, 128], strides = [1, 1]} : vector<8x128xf32> to vector<1x128xf32>
    %286 = vector.shape_cast %285 : vector<1x128xf32> to vector<1x128xf32>
    %287 = vector.broadcast %286 : vector<1x128xf32> to vector<8x128xf32>
    %288 = arith.select %75, %287, %284 : vector<8x128xi1>, vector<8x128xf32>
    %289 = vector.extract_strided_slice %56 {offsets = [6, 0], sizes = [1, 128], strides = [1, 1]} : vector<8x128xf32> to vector<1x128xf32>
    %290 = vector.shape_cast %289 : vector<1x128xf32> to vector<1x128xf32>
    %291 = vector.broadcast %290 : vector<1x128xf32> to vector<8x128xf32>
    %292 = arith.select %77, %291, %288 : vector<8x128xi1>, vector<8x128xf32>
    %293 = vector.extract_strided_slice %64 {offsets = [6, 0], sizes = [1, 128], strides = [1, 1]} : vector<8x128xf32> to vector<1x128xf32>
    %294 = vector.shape_cast %293 : vector<1x128xf32> to vector<1x128xf32>
    %295 = vector.broadcast %294 : vector<1x128xf32> to vector<8x128xf32>
    %296 = arith.select %79, %295, %292 : vector<8x128xi1>, vector<8x128xf32>
    %297 = vector.extract_strided_slice %8 {offsets = [7, 0], sizes = [1, 128], strides = [1, 1]} : vector<8x128xf32> to vector<1x128xf32>
    %298 = vector.shape_cast %297 : vector<1x128xf32> to vector<1x128xf32>
    %299 = vector.broadcast %298 : vector<1x128xf32> to vector<8x128xf32>
    %300 = vector.extract_strided_slice %16 {offsets = [7, 0], sizes = [1, 128], strides = [1, 1]} : vector<8x128xf32> to vector<1x128xf32>
    %301 = vector.shape_cast %300 : vector<1x128xf32> to vector<1x128xf32>
    %302 = vector.broadcast %301 : vector<1x128xf32> to vector<8x128xf32>
    %303 = arith.select %67, %302, %299 : vector<8x128xi1>, vector<8x128xf32>
    %304 = vector.extract_strided_slice %24 {offsets = [7, 0], sizes = [1, 128], strides = [1, 1]} : vector<8x128xf32> to vector<1x128xf32>
    %305 = vector.shape_cast %304 : vector<1x128xf32> to vector<1x128xf32>
    %306 = vector.broadcast %305 : vector<1x128xf32> to vector<8x128xf32>
    %307 = arith.select %69, %306, %303 : vector<8x128xi1>, vector<8x128xf32>
    %308 = vector.extract_strided_slice %32 {offsets = [7, 0], sizes = [1, 128], strides = [1, 1]} : vector<8x128xf32> to vector<1x128xf32>
    %309 = vector.shape_cast %308 : vector<1x128xf32> to vector<1x128xf32>
    %310 = vector.broadcast %309 : vector<1x128xf32> to vector<8x128xf32>
    %311 = arith.select %71, %310, %307 : vector<8x128xi1>, vector<8x128xf32>
    %312 = vector.extract_strided_slice %40 {offsets = [7, 0], sizes = [1, 128], strides = [1, 1]} : vector<8x128xf32> to vector<1x128xf32>
    %313 = vector.shape_cast %312 : vector<1x128xf32> to vector<1x128xf32>
    %314 = vector.broadcast %313 : vector<1x128xf32> to vector<8x128xf32>
    %315 = arith.select %73, %314, %311 : vector<8x128xi1>, vector<8x128xf32>
    %316 = vector.extract_strided_slice %48 {offsets = [7, 0], sizes = [1, 128], strides = [1, 1]} : vector<8x128xf32> to vector<1x128xf32>
    %317 = vector.shape_cast %316 : vector<1x128xf32> to vector<1x128xf32>
    %318 = vector.broadcast %317 : vector<1x128xf32> to vector<8x128xf32>
    %319 = arith.select %75, %318, %315 : vector<8x128xi1>, vector<8x128xf32>
    %320 = vector.extract_strided_slice %56 {offsets = [7, 0], sizes = [1, 128], strides = [1, 1]} : vector<8x128xf32> to vector<1x128xf32>
    %321 = vector.shape_cast %320 : vector<1x128xf32> to vector<1x128xf32>
    %322 = vector.broadcast %321 : vector<1x128xf32> to vector<8x128xf32>
    %323 = arith.select %77, %322, %319 : vector<8x128xi1>, vector<8x128xf32>
    %324 = vector.extract_strided_slice %64 {offsets = [7, 0], sizes = [1, 128], strides = [1, 1]} : vector<8x128xf32> to vector<1x128xf32>
    %325 = vector.shape_cast %324 : vector<1x128xf32> to vector<1x128xf32>
    %326 = vector.broadcast %325 : vector<1x128xf32> to vector<8x128xf32>
    %327 = arith.select %79, %326, %323 : vector<8x128xi1>, vector<8x128xf32>
    %328 = tpu.iota {dimensions = array<i32: 1>} : vector<1x128xi32>
    %c0_39 = arith.constant 0 : index
    %c0_40 = arith.constant 0 : index
    %329 = vector.load %arg2[%c0_39, %c0_40] : memref<8x128xi32, #tpu.memory_space<vmem>>, vector<8x128xi32>
    %c0_41 = arith.constant 0 : index
    %c0_42 = arith.constant 0 : index
    %330 = vector.load %arg3[%c0_41, %c0_42] : memref<8x1xi32, #tpu.memory_space<vmem>>, vector<8x1xi32>
    %c0_43 = arith.constant 0 : index
    %c0_44 = arith.constant 0 : index
    %331 = vector.load %arg4[%c0_43, %c0_44] : memref<8x1xi32, #tpu.memory_space<vmem>>, vector<8x1xi32>
    %c2_i32_45 = arith.constant 2 : i32
    %332 = vector.broadcast %c2_i32_45 : i32 to vector<8x1xi32>
    %333 = arith.muli %332, %331 : vector<8x1xi32>
    %c1_i32_46 = arith.constant 1 : i32
    %334 = vector.broadcast %c1_i32_46 : i32 to vector<8x1xi32>
    %335 = arith.addi %333, %334 : vector<8x1xi32>
    %336 = vector.broadcast %328 : vector<1x128xi32> to vector<8x128xi32>
    %337 = vector.broadcast %335 : vector<8x1xi32> to vector<8x128xi32>
    %338 = arith.cmpi slt, %336, %337 : vector<8x128xi32>
    %cst_47 = arith.constant 0.000000e+00 : f32
    %cst_48 = arith.constant 0xFF800000 : f32
    %339 = vector.broadcast %cst_47 : f32 to vector<8x128xf32>
    %340 = vector.broadcast %cst_48 : f32 to vector<8x128xf32>
    %341 = arith.select %338, %339, %340 : vector<8x128xi1>, vector<8x128xf32>
    %c1_i32_49 = arith.constant 1 : i32
    %342 = vector.broadcast %c1_i32_49 : i32 to vector<1x128xi32>
    %343 = arith.cmpi sge, %328, %342 : vector<1x128xi32>
    %cst_50 = arith.constant 0.000000e+00 : f32
    %cst_51 = arith.constant 0xFF800000 : f32
    %344 = vector.broadcast %cst_50 : f32 to vector<1x128xf32>
    %345 = vector.broadcast %cst_51 : f32 to vector<1x128xf32>
    %346 = arith.select %343, %344, %345 : vector<1x128xi1>, vector<1x128xf32>
    %c2_i32_52 = arith.constant 2 : i32
    %347 = vector.broadcast %c2_i32_52 : i32 to vector<1x128xi32>
    %348 = arith.cmpi sge, %328, %347 : vector<1x128xi32>
    %c0_i32 = arith.constant 0 : i32
    %349 = vector.broadcast %c0_i32 : i32 to vector<8x128xi32>
    %350 = arith.cmpi ne, %329, %349 : vector<8x128xi32>
    %351 = vector.broadcast %348 : vector<1x128xi1> to vector<8x128xi1>
    %352 = arith.andi %351, %350 : vector<8x128xi1>
    %c2_i32_53 = arith.constant 2 : i32
    %353 = tpu.dynamic_rotate %329 by %c2_i32_53 dim 1 : vector<8x128xi32>, i32 -> vector<8x128xi32>
    %354 = arith.cmpi ne, %329, %353 : vector<8x128xi32>
    %355 = arith.andi %352, %354 : vector<8x128xi1>
    %cst_54 = arith.constant 0.000000e+00 : f32
    %cst_55 = arith.constant 0xFF800000 : f32
    %356 = vector.broadcast %cst_54 : f32 to vector<8x128xf32>
    %357 = vector.broadcast %cst_55 : f32 to vector<8x128xf32>
    %358 = arith.select %355, %356, %357 : vector<8x128xi1>, vector<8x128xf32>
    %c2_i32_56 = arith.constant 2 : i32
    %359 = vector.broadcast %c2_i32_56 : i32 to vector<8x1xi32>
    %360 = arith.minsi %335, %359 : vector<8x1xi32>
    %361 = vector.broadcast %328 : vector<1x128xi32> to vector<8x128xi32>
    %362 = vector.broadcast %360 : vector<8x1xi32> to vector<8x128xi32>
    %363 = arith.cmpi slt, %361, %362 : vector<8x128xi32>
    %cst_57 = arith.constant 0xFF800000 : f32
    %364 = vector.broadcast %cst_57 : f32 to vector<8x128xf32>
    %365 = arith.select %363, %110, %364 : vector<8x128xi1>, vector<8x128xf32>
    %c1_i32_58 = arith.constant 1 : i32
    %366 = tpu.dynamic_rotate %365 by %c1_i32_58 dim 1 : vector<8x128xf32>, i32 -> vector<8x128xf32>
    %367 = vector.broadcast %346 : vector<1x128xf32> to vector<8x128xf32>
    %368 = arith.addf %366, %367 : vector<8x128xf32>
    %c2_i32_59 = arith.constant 2 : i32
    %369 = tpu.dynamic_rotate %365 by %c2_i32_59 dim 1 : vector<8x128xf32>, i32 -> vector<8x128xf32>
    %370 = arith.addf %369, %358 : vector<8x128xf32>
    %371 = arith.maximumf %365, %368 : vector<8x128xf32>
    %372 = arith.maximumf %371, %370 : vector<8x128xf32>
    %cst_60 = arith.constant 0xFF800000 : f32
    %373 = vector.broadcast %cst_60 : f32 to vector<8x128xf32>
    %374 = arith.cmpf oeq, %372, %373 : vector<8x128xf32>
    %cst_61 = arith.constant 0.000000e+00 : f32
    %375 = vector.broadcast %cst_61 : f32 to vector<8x128xf32>
    %376 = arith.select %374, %375, %372 : vector<8x128xi1>, vector<8x128xf32>
    %377 = arith.subf %365, %376 : vector<8x128xf32>
    %378 = math.exp %377 : vector<8x128xf32>
    %379 = arith.subf %368, %376 : vector<8x128xf32>
    %380 = math.exp %379 : vector<8x128xf32>
    %381 = arith.addf %378, %380 : vector<8x128xf32>
    %382 = arith.subf %370, %376 : vector<8x128xf32>
    %383 = math.exp %382 : vector<8x128xf32>
    %384 = arith.addf %381, %383 : vector<8x128xf32>
    %385 = math.log %384 : vector<8x128xf32>
    %386 = arith.addf %376, %385 : vector<8x128xf32>
    %387 = arith.addf %141, %386 : vector<8x128xf32>
    %388 = arith.addf %387, %341 : vector<8x128xf32>
    %c1_i32_62 = arith.constant 1 : i32
    %389 = vector.broadcast %c1_i32_62 : i32 to vector<8x1xi32>
    %390 = arith.cmpi sgt, %330, %389 : vector<8x1xi32>
    %391 = vector.shape_cast %390 : vector<8x1xi1> to vector<8x1xi1>
    %392 = vector.broadcast %391 : vector<8x1xi1> to vector<8x128xi1>
    %393 = arith.select %392, %388, %365 : vector<8x128xi1>, vector<8x128xf32>
    %c1_i32_63 = arith.constant 1 : i32
    %394 = tpu.dynamic_rotate %393 by %c1_i32_63 dim 1 : vector<8x128xf32>, i32 -> vector<8x128xf32>
    %395 = vector.broadcast %346 : vector<1x128xf32> to vector<8x128xf32>
    %396 = arith.addf %394, %395 : vector<8x128xf32>
    %c2_i32_64 = arith.constant 2 : i32
    %397 = tpu.dynamic_rotate %393 by %c2_i32_64 dim 1 : vector<8x128xf32>, i32 -> vector<8x128xf32>
    %398 = arith.addf %397, %358 : vector<8x128xf32>
    %399 = arith.maximumf %393, %396 : vector<8x128xf32>
    %400 = arith.maximumf %399, %398 : vector<8x128xf32>
    %cst_65 = arith.constant 0xFF800000 : f32
    %401 = vector.broadcast %cst_65 : f32 to vector<8x128xf32>
    %402 = arith.cmpf oeq, %400, %401 : vector<8x128xf32>
    %cst_66 = arith.constant 0.000000e+00 : f32
    %403 = vector.broadcast %cst_66 : f32 to vector<8x128xf32>
    %404 = arith.select %402, %403, %400 : vector<8x128xi1>, vector<8x128xf32>
    %405 = arith.subf %393, %404 : vector<8x128xf32>
    %406 = math.exp %405 : vector<8x128xf32>
    %407 = arith.subf %396, %404 : vector<8x128xf32>
    %408 = math.exp %407 : vector<8x128xf32>
    %409 = arith.addf %406, %408 : vector<8x128xf32>
    %410 = arith.subf %398, %404 : vector<8x128xf32>
    %411 = math.exp %410 : vector<8x128xf32>
    %412 = arith.addf %409, %411 : vector<8x128xf32>
    %413 = math.log %412 : vector<8x128xf32>
    %414 = arith.addf %404, %413 : vector<8x128xf32>
    %415 = arith.addf %172, %414 : vector<8x128xf32>
    %416 = arith.addf %415, %341 : vector<8x128xf32>
    %c2_i32_67 = arith.constant 2 : i32
    %417 = vector.broadcast %c2_i32_67 : i32 to vector<8x1xi32>
    %418 = arith.cmpi sgt, %330, %417 : vector<8x1xi32>
    %419 = vector.shape_cast %418 : vector<8x1xi1> to vector<8x1xi1>
    %420 = vector.broadcast %419 : vector<8x1xi1> to vector<8x128xi1>
    %421 = arith.select %420, %416, %393 : vector<8x128xi1>, vector<8x128xf32>
    %c1_i32_68 = arith.constant 1 : i32
    %422 = tpu.dynamic_rotate %421 by %c1_i32_68 dim 1 : vector<8x128xf32>, i32 -> vector<8x128xf32>
    %423 = vector.broadcast %346 : vector<1x128xf32> to vector<8x128xf32>
    %424 = arith.addf %422, %423 : vector<8x128xf32>
    %c2_i32_69 = arith.constant 2 : i32
    %425 = tpu.dynamic_rotate %421 by %c2_i32_69 dim 1 : vector<8x128xf32>, i32 -> vector<8x128xf32>
    %426 = arith.addf %425, %358 : vector<8x128xf32>
    %427 = arith.maximumf %421, %424 : vector<8x128xf32>
    %428 = arith.maximumf %427, %426 : vector<8x128xf32>
    %cst_70 = arith.constant 0xFF800000 : f32
    %429 = vector.broadcast %cst_70 : f32 to vector<8x128xf32>
    %430 = arith.cmpf oeq, %428, %429 : vector<8x128xf32>
    %cst_71 = arith.constant 0.000000e+00 : f32
    %431 = vector.broadcast %cst_71 : f32 to vector<8x128xf32>
    %432 = arith.select %430, %431, %428 : vector<8x128xi1>, vector<8x128xf32>
    %433 = arith.subf %421, %432 : vector<8x128xf32>
    %434 = math.exp %433 : vector<8x128xf32>
    %435 = arith.subf %424, %432 : vector<8x128xf32>
    %436 = math.exp %435 : vector<8x128xf32>
    %437 = arith.addf %434, %436 : vector<8x128xf32>
    %438 = arith.subf %426, %432 : vector<8x128xf32>
    %439 = math.exp %438 : vector<8x128xf32>
    %440 = arith.addf %437, %439 : vector<8x128xf32>
    %441 = math.log %440 : vector<8x128xf32>
    %442 = arith.addf %432, %441 : vector<8x128xf32>
    %443 = arith.addf %203, %442 : vector<8x128xf32>
    %444 = arith.addf %443, %341 : vector<8x128xf32>
    %c3_i32_72 = arith.constant 3 : i32
    %445 = vector.broadcast %c3_i32_72 : i32 to vector<8x1xi32>
    %446 = arith.cmpi sgt, %330, %445 : vector<8x1xi32>
    %447 = vector.shape_cast %446 : vector<8x1xi1> to vector<8x1xi1>
    %448 = vector.broadcast %447 : vector<8x1xi1> to vector<8x128xi1>
    %449 = arith.select %448, %444, %421 : vector<8x128xi1>, vector<8x128xf32>
    %c1_i32_73 = arith.constant 1 : i32
    %450 = tpu.dynamic_rotate %449 by %c1_i32_73 dim 1 : vector<8x128xf32>, i32 -> vector<8x128xf32>
    %451 = vector.broadcast %346 : vector<1x128xf32> to vector<8x128xf32>
    %452 = arith.addf %450, %451 : vector<8x128xf32>
    %c2_i32_74 = arith.constant 2 : i32
    %453 = tpu.dynamic_rotate %449 by %c2_i32_74 dim 1 : vector<8x128xf32>, i32 -> vector<8x128xf32>
    %454 = arith.addf %453, %358 : vector<8x128xf32>
    %455 = arith.maximumf %449, %452 : vector<8x128xf32>
    %456 = arith.maximumf %455, %454 : vector<8x128xf32>
    %cst_75 = arith.constant 0xFF800000 : f32
    %457 = vector.broadcast %cst_75 : f32 to vector<8x128xf32>
    %458 = arith.cmpf oeq, %456, %457 : vector<8x128xf32>
    %cst_76 = arith.constant 0.000000e+00 : f32
    %459 = vector.broadcast %cst_76 : f32 to vector<8x128xf32>
    %460 = arith.select %458, %459, %456 : vector<8x128xi1>, vector<8x128xf32>
    %461 = arith.subf %449, %460 : vector<8x128xf32>
    %462 = math.exp %461 : vector<8x128xf32>
    %463 = arith.subf %452, %460 : vector<8x128xf32>
    %464 = math.exp %463 : vector<8x128xf32>
    %465 = arith.addf %462, %464 : vector<8x128xf32>
    %466 = arith.subf %454, %460 : vector<8x128xf32>
    %467 = math.exp %466 : vector<8x128xf32>
    %468 = arith.addf %465, %467 : vector<8x128xf32>
    %469 = math.log %468 : vector<8x128xf32>
    %470 = arith.addf %460, %469 : vector<8x128xf32>
    %471 = arith.addf %234, %470 : vector<8x128xf32>
    %472 = arith.addf %471, %341 : vector<8x128xf32>
    %c4_i32_77 = arith.constant 4 : i32
    %473 = vector.broadcast %c4_i32_77 : i32 to vector<8x1xi32>
    %474 = arith.cmpi sgt, %330, %473 : vector<8x1xi32>
    %475 = vector.shape_cast %474 : vector<8x1xi1> to vector<8x1xi1>
    %476 = vector.broadcast %475 : vector<8x1xi1> to vector<8x128xi1>
    %477 = arith.select %476, %472, %449 : vector<8x128xi1>, vector<8x128xf32>
    %c1_i32_78 = arith.constant 1 : i32
    %478 = tpu.dynamic_rotate %477 by %c1_i32_78 dim 1 : vector<8x128xf32>, i32 -> vector<8x128xf32>
    %479 = vector.broadcast %346 : vector<1x128xf32> to vector<8x128xf32>
    %480 = arith.addf %478, %479 : vector<8x128xf32>
    %c2_i32_79 = arith.constant 2 : i32
    %481 = tpu.dynamic_rotate %477 by %c2_i32_79 dim 1 : vector<8x128xf32>, i32 -> vector<8x128xf32>
    %482 = arith.addf %481, %358 : vector<8x128xf32>
    %483 = arith.maximumf %477, %480 : vector<8x128xf32>
    %484 = arith.maximumf %483, %482 : vector<8x128xf32>
    %cst_80 = arith.constant 0xFF800000 : f32
    %485 = vector.broadcast %cst_80 : f32 to vector<8x128xf32>
    %486 = arith.cmpf oeq, %484, %485 : vector<8x128xf32>
    %cst_81 = arith.constant 0.000000e+00 : f32
    %487 = vector.broadcast %cst_81 : f32 to vector<8x128xf32>
    %488 = arith.select %486, %487, %484 : vector<8x128xi1>, vector<8x128xf32>
    %489 = arith.subf %477, %488 : vector<8x128xf32>
    %490 = math.exp %489 : vector<8x128xf32>
    %491 = arith.subf %480, %488 : vector<8x128xf32>
    %492 = math.exp %491 : vector<8x128xf32>
    %493 = arith.addf %490, %492 : vector<8x128xf32>
    %494 = arith.subf %482, %488 : vector<8x128xf32>
    %495 = math.exp %494 : vector<8x128xf32>
    %496 = arith.addf %493, %495 : vector<8x128xf32>
    %497 = math.log %496 : vector<8x128xf32>
    %498 = arith.addf %488, %497 : vector<8x128xf32>
    %499 = arith.addf %265, %498 : vector<8x128xf32>
    %500 = arith.addf %499, %341 : vector<8x128xf32>
    %c5_i32_82 = arith.constant 5 : i32
    %501 = vector.broadcast %c5_i32_82 : i32 to vector<8x1xi32>
    %502 = arith.cmpi sgt, %330, %501 : vector<8x1xi32>
    %503 = vector.shape_cast %502 : vector<8x1xi1> to vector<8x1xi1>
    %504 = vector.broadcast %503 : vector<8x1xi1> to vector<8x128xi1>
    %505 = arith.select %504, %500, %477 : vector<8x128xi1>, vector<8x128xf32>
    %c1_i32_83 = arith.constant 1 : i32
    %506 = tpu.dynamic_rotate %505 by %c1_i32_83 dim 1 : vector<8x128xf32>, i32 -> vector<8x128xf32>
    %507 = vector.broadcast %346 : vector<1x128xf32> to vector<8x128xf32>
    %508 = arith.addf %506, %507 : vector<8x128xf32>
    %c2_i32_84 = arith.constant 2 : i32
    %509 = tpu.dynamic_rotate %505 by %c2_i32_84 dim 1 : vector<8x128xf32>, i32 -> vector<8x128xf32>
    %510 = arith.addf %509, %358 : vector<8x128xf32>
    %511 = arith.maximumf %505, %508 : vector<8x128xf32>
    %512 = arith.maximumf %511, %510 : vector<8x128xf32>
    %cst_85 = arith.constant 0xFF800000 : f32
    %513 = vector.broadcast %cst_85 : f32 to vector<8x128xf32>
    %514 = arith.cmpf oeq, %512, %513 : vector<8x128xf32>
    %cst_86 = arith.constant 0.000000e+00 : f32
    %515 = vector.broadcast %cst_86 : f32 to vector<8x128xf32>
    %516 = arith.select %514, %515, %512 : vector<8x128xi1>, vector<8x128xf32>
    %517 = arith.subf %505, %516 : vector<8x128xf32>
    %518 = math.exp %517 : vector<8x128xf32>
    %519 = arith.subf %508, %516 : vector<8x128xf32>
    %520 = math.exp %519 : vector<8x128xf32>
    %521 = arith.addf %518, %520 : vector<8x128xf32>
    %522 = arith.subf %510, %516 : vector<8x128xf32>
    %523 = math.exp %522 : vector<8x128xf32>
    %524 = arith.addf %521, %523 : vector<8x128xf32>
    %525 = math.log %524 : vector<8x128xf32>
    %526 = arith.addf %516, %525 : vector<8x128xf32>
    %527 = arith.addf %296, %526 : vector<8x128xf32>
    %528 = arith.addf %527, %341 : vector<8x128xf32>
    %c6_i32_87 = arith.constant 6 : i32
    %529 = vector.broadcast %c6_i32_87 : i32 to vector<8x1xi32>
    %530 = arith.cmpi sgt, %330, %529 : vector<8x1xi32>
    %531 = vector.shape_cast %530 : vector<8x1xi1> to vector<8x1xi1>
    %532 = vector.broadcast %531 : vector<8x1xi1> to vector<8x128xi1>
    %533 = arith.select %532, %528, %505 : vector<8x128xi1>, vector<8x128xf32>
    %c1_i32_88 = arith.constant 1 : i32
    %534 = tpu.dynamic_rotate %533 by %c1_i32_88 dim 1 : vector<8x128xf32>, i32 -> vector<8x128xf32>
    %535 = vector.broadcast %346 : vector<1x128xf32> to vector<8x128xf32>
    %536 = arith.addf %534, %535 : vector<8x128xf32>
    %c2_i32_89 = arith.constant 2 : i32
    %537 = tpu.dynamic_rotate %533 by %c2_i32_89 dim 1 : vector<8x128xf32>, i32 -> vector<8x128xf32>
    %538 = arith.addf %537, %358 : vector<8x128xf32>
    %539 = arith.maximumf %533, %536 : vector<8x128xf32>
    %540 = arith.maximumf %539, %538 : vector<8x128xf32>
    %cst_90 = arith.constant 0xFF800000 : f32
    %541 = vector.broadcast %cst_90 : f32 to vector<8x128xf32>
    %542 = arith.cmpf oeq, %540, %541 : vector<8x128xf32>
    %cst_91 = arith.constant 0.000000e+00 : f32
    %543 = vector.broadcast %cst_91 : f32 to vector<8x128xf32>
    %544 = arith.select %542, %543, %540 : vector<8x128xi1>, vector<8x128xf32>
    %545 = arith.subf %533, %544 : vector<8x128xf32>
    %546 = math.exp %545 : vector<8x128xf32>
    %547 = arith.subf %536, %544 : vector<8x128xf32>
    %548 = math.exp %547 : vector<8x128xf32>
    %549 = arith.addf %546, %548 : vector<8x128xf32>
    %550 = arith.subf %538, %544 : vector<8x128xf32>
    %551 = math.exp %550 : vector<8x128xf32>
    %552 = arith.addf %549, %551 : vector<8x128xf32>
    %553 = math.log %552 : vector<8x128xf32>
    %554 = arith.addf %544, %553 : vector<8x128xf32>
    %555 = arith.addf %327, %554 : vector<8x128xf32>
    %556 = arith.addf %555, %341 : vector<8x128xf32>
    %c7_i32_92 = arith.constant 7 : i32
    %557 = vector.broadcast %c7_i32_92 : i32 to vector<8x1xi32>
    %558 = arith.cmpi sgt, %330, %557 : vector<8x1xi32>
    %559 = vector.shape_cast %558 : vector<8x1xi1> to vector<8x1xi1>
    %560 = vector.broadcast %559 : vector<8x1xi1> to vector<8x128xi1>
    %561 = arith.select %560, %556, %533 : vector<8x128xi1>, vector<8x128xf32>
    %c1_i32_93 = arith.constant 1 : i32
    %562 = vector.broadcast %c1_i32_93 : i32 to vector<8x1xi32>
    %563 = arith.subi %335, %562 : vector<8x1xi32>
    %564 = vector.broadcast %328 : vector<1x128xi32> to vector<8x128xi32>
    %565 = vector.broadcast %563 : vector<8x1xi32> to vector<8x128xi32>
    %566 = arith.cmpi eq, %564, %565 : vector<8x128xi32>
    %cst_94 = arith.constant 0xFF800000 : f32
    %567 = vector.broadcast %cst_94 : f32 to vector<8x128xf32>
    %568 = arith.select %566, %561, %567 : vector<8x128xi1>, vector<8x128xf32>
    %cst_95 = arith.constant dense<0xFF800000> : vector<8xf32>
    %569 = vector.multi_reduction <maximumf>, %568, %cst_95 [1] : vector<8x128xf32> to vector<8xf32>
    %570 = vector.shape_cast %569 : vector<8xf32> to vector<8x1xf32>
    %c2_i32_96 = arith.constant 2 : i32
    %571 = vector.broadcast %c2_i32_96 : i32 to vector<8x1xi32>
    %572 = arith.subi %335, %571 : vector<8x1xi32>
    %573 = vector.broadcast %328 : vector<1x128xi32> to vector<8x128xi32>
    %574 = vector.broadcast %572 : vector<8x1xi32> to vector<8x128xi32>
    %575 = arith.cmpi eq, %573, %574 : vector<8x128xi32>
    %cst_97 = arith.constant 0xFF800000 : f32
    %576 = vector.broadcast %cst_97 : f32 to vector<8x128xf32>
    %577 = arith.select %575, %561, %576 : vector<8x128xi1>, vector<8x128xf32>
    %cst_98 = arith.constant dense<0xFF800000> : vector<8xf32>
    %578 = vector.multi_reduction <maximumf>, %577, %cst_98 [1] : vector<8x128xf32> to vector<8xf32>
    %579 = vector.shape_cast %578 : vector<8xf32> to vector<8x1xf32>
    %580 = arith.maximumf %570, %579 : vector<8x1xf32>
    %cst_99 = arith.constant 0xFF800000 : f32
    %581 = vector.broadcast %cst_99 : f32 to vector<8x1xf32>
    %582 = arith.cmpf oeq, %580, %581 : vector<8x1xf32>
    %cst_100 = arith.constant 0.000000e+00 : f32
    %583 = vector.broadcast %cst_100 : f32 to vector<8x1xf32>
    %584 = arith.select %582, %583, %580 : vector<8x1xi1>, vector<8x1xf32>
    %585 = arith.subf %570, %584 : vector<8x1xf32>
    %586 = math.exp %585 : vector<8x1xf32>
    %587 = arith.subf %579, %584 : vector<8x1xf32>
    %588 = math.exp %587 : vector<8x1xf32>
    %589 = arith.addf %586, %588 : vector<8x1xf32>
    %590 = math.log %589 : vector<8x1xf32>
    %591 = arith.addf %584, %590 : vector<8x1xf32>
    %cst_101 = arith.constant 0.000000e+00 : f32
    %592 = vector.broadcast %cst_101 : f32 to vector<8x1xf32>
    %593 = arith.subf %592, %591 : vector<8x1xf32>
    %c1_i32_102 = arith.constant 1 : i32
    %594 = vector.broadcast %c1_i32_102 : i32 to vector<8x1xi32>
    %595 = arith.maxsi %331, %594 : vector<8x1xi32>
    %596 = arith.sitofp %595 : vector<8x1xi32> to vector<8x1xf32>
    %597 = arith.divf %593, %596 : vector<8x1xf32>
    %598 = vector.shape_cast %597 : vector<8x1xf32> to vector<8x1xf32>
    %599 = vector.broadcast %598 : vector<8x1xf32> to vector<8x128xf32>
    %c0_103 = arith.constant 0 : index
    %c0_104 = arith.constant 0 : index
    %600 = vector.load %arg5[%c0_103, %c0_104] : memref<8x128xf32, #tpu.memory_space<vmem>>, vector<8x128xf32>
    tpu.vector_store %arg5[%c0_103, %c0_104], %599 {strides = array<i32>} : memref<8x128xf32, #tpu.memory_space<vmem>>, vector<8x128xf32>,
    return
  }
  func.func @transform_0(%arg0: i32) -> (i32, i32, i32) {
    %c0_i32 = arith.constant 0 : i32
    %c0_i32_0 = arith.constant 0 : i32
    %c0_i32_1 = arith.constant 0 : i32
    return %arg0, %c0_i32, %c0_i32_0 : i32, i32, i32
  }
  func.func @transform_1(%arg0: i32) -> (i32, i32) {
    %c0_i32 = arith.constant 0 : i32
    %c0_i32_0 = arith.constant 0 : i32
    return %arg0, %c0_i32 : i32, i32
  }
  func.func @transform_2(%arg0: i32) -> (i32, i32) {
    %c0_i32 = arith.constant 0 : i32
    %c0_i32_0 = arith.constant 0 : i32
    return %arg0, %c0_i32 : i32, i32
  }
  func.func @transform_3(%arg0: i32) -> (i32, i32) {
    %c0_i32 = arith.constant 0 : i32
    %c0_i32_0 = arith.constant 0 : i32
    return %arg0, %c0_i32 : i32, i32
  }
  func.func @transform_4(%arg0: i32) -> (i32, i32) {
    %c0_i32 = arith.constant 0 : i32
    %c0_i32_0 = arith.constant 0 : i32
    return %arg0, %c0_i32 : i32, i32
  }
}

</mosaic_0001>

<llo_original>
// kernel: tpu_custom_call.1
$region0: #{tpu_custom_call.1}
  #allocation0 [shape = 'u32[]', space=smem, size = 0x4, offset = 0x4, fixed_abs, tag = 'smem constant byte address 0x4 - core index']
  #allocation1 [shape = 'u32[72,128]{1,0:T(1,128)}', space=vmem, size = 0x9000, scoped, tag = 'internal scratch']
  %s0 = inlined_call_operand.hbm [shape: f32[8,8,128], index: 0, kind: input, shape index: {}]
  %s1 = inlined_call_operand.vmem [shape: s32[8,128], index: 1, kind: input, shape index: {}]
  %s2 = inlined_call_operand.vmem [shape: s32[8,1], index: 2, kind: input, shape index: {}]
  %s3 = inlined_call_operand.vmem [shape: s32[8,1], index: 3, kind: input, shape index: {}]
  %s4 = inlined_call_operand.hbm [shape: f32[8,128], index: 4, kind: output, shape index: {}]
  %s5 = sld [smem:[#allocation0]]
  $region30: #{tpu_custom_call.1} parent=0
    _
  %s7 = ssub.s32 1, %s5
  %s8 = scalar_select 0, %s7, %s5
  $region1: #{tpu_custom_call.1} parent=0
    #allocation2 [shape = 'u8[32768]{0}', space=vmem, size = 0x8000, scoped, tag = 'input window, operand 0, single buffered']
    #allocation3 [shape = 's32[1]{0}', space=sflag, size = 0x4, scoped, tag = 'scoped memory for tpu_custom_call.1']
    #allocation4 [shape = 's32[1]{0}', space=sflag, size = 0x4, scoped, tag = 'scoped memory for tpu_custom_call.1']
    #allocation5 [shape = 'u8[4096]{0}', space=vmem, size = 0x1000, scoped, tag = 'output window, operand 0, single buffered']
    %9 = vsyncpa [#allocation3], 0
    %10 = vsyncpa [#allocation4], 0
    // Predicated region
    $region2: #{tpu_custom_call.1} parent=1 // pred_check
      _
    $region3: #{tpu_custom_call.1} parent=1 // pred_check_branch
      %12 = sbr.rel (0) target = $region5
    $region4: #{tpu_custom_call.1} parent=1 // pred_region
      %14 = vsyncadd [#allocation3], 0
      %s15 = sshll.u32 %s0, 4
      %s16 = int_to_ptr.hbm [resolvable:$true] %s15
      %s17 = sshll.u32 [#allocation2], 4
      %s18 = int_to_ptr.vmem [resolvable:$true] %s17
      %23 = dma.hbm_to_vmem [thread:$0]  %s16, 1024, %s18, [#allocation3], 128, 128, 8
    $region5: #{tpu_custom_call.1} parent=1 // pred_fallthru
      _
    // Predicated region
    $region6: #{tpu_custom_call.1} parent=1 // pred_check
      _
    $region7: #{tpu_custom_call.1} parent=1 // pred_check_branch
      %25 = sbr.rel (0) target = $region9
    $region8: #{tpu_custom_call.1} parent=1 // pred_region
      _
    $region9: #{tpu_custom_call.1} parent=1 // pred_fallthru
      _
    // Predicated region
    $region10: #{tpu_custom_call.1} parent=1 // pred_check
      _
    $region11: #{tpu_custom_call.1} parent=1 // pred_check_branch
      %27 = sbr.rel (0) target = $region13
    $region12: #{tpu_custom_call.1} parent=1 // pred_region
      _
    $region13: #{tpu_custom_call.1} parent=1 // pred_fallthru
      _
    // Predicated region
    $region14: #{tpu_custom_call.1} parent=1 // pred_check
      _
    $region15: #{tpu_custom_call.1} parent=1 // pred_check_branch
      %29 = sbr.rel (0) target = $region17
    $region16: #{tpu_custom_call.1} parent=1 // pred_region
      _
    $region17: #{tpu_custom_call.1} parent=1 // pred_fallthru
      _
    // Predicated region
    $region18: #{tpu_custom_call.1} parent=1 // pred_check
      _
    $region19: #{tpu_custom_call.1} parent=1 // pred_check_branch
      %31 = sbr.rel (0) target = $region21
    $region20: #{tpu_custom_call.1} parent=1 // pred_region
      %33 = dma.done [#allocation3], 1024
    $region21: #{tpu_custom_call.1} parent=1 // pred_fallthru
      _
    %v34 = vlaneseq
    %v35 = vshrl.u32 %v34, 7
    %v36 = vadd.s32 %v35, 8
    %v37 = vadd.s32 %v35, 16
    %v38 = vadd.s32 %v35, 24
    %v39 = vadd.s32 %v35, 32
    %v40 = vadd.s32 %v35, 40
    %v41 = vadd.s32 %v35, 48
    %v42 = vadd.s32 %v35, 56
    %v43 = vadd.s32 %v35, 64
    %v44 = vadd.s32 %v35, 72
    %v45 = vadd.s32 %v35, 80
    %v46 = vadd.s32 %v35, 88
    %v47 = vadd.s32 %v35, 96
    %v48 = vadd.s32 %v35, 104
    %v49 = vadd.s32 %v35, 112
    %v50 = vadd.s32 %v35, 120
    %v51 = vld [vmem:[%s1] sm:$0x1]
    %v52 = vperm.slane %v51, 0
    %vm53 = vcmp.eq.s32.totalorder %v35, %v52
    %vm54 = vcmp.eq.s32.totalorder %v36, %v52
    %vm55 = vcmp.eq.s32.totalorder %v37, %v52
    %vm56 = vcmp.eq.s32.totalorder %v38, %v52
    %vm57 = vcmp.eq.s32.totalorder %v39, %v52
    %vm58 = vcmp.eq.s32.totalorder %v40, %v52
    %vm59 = vcmp.eq.s32.totalorder %v41, %v52
    %vm60 = vcmp.eq.s32.totalorder %v42, %v52
    %vm61 = vcmp.eq.s32.totalorder %v43, %v52
    %vm62 = vcmp.eq.s32.totalorder %v44, %v52
    %vm63 = vcmp.eq.s32.totalorder %v45, %v52
    %vm64 = vcmp.eq.s32.totalorder %v46, %v52
    %vm65 = vcmp.eq.s32.totalorder %v47, %v52
    %vm66 = vcmp.eq.s32.totalorder %v48, %v52
    %vm67 = vcmp.eq.s32.totalorder %v49, %v52
    %vm68 = vcmp.eq.s32.totalorder %v50, %v52
    %v69 = vsel %vm53, 1, 0
    %v70 = vsel %vm54, 1, 0
    %v71 = vsel %vm55, 1, 0
    %v72 = vsel %vm56, 1, 0
    %v73 = vsel %vm57, 1, 0
    %v74 = vsel %vm58, 1, 0
    %v75 = vsel %vm59, 1, 0
    %v76 = vsel %vm60, 1, 0
    %v77 = vsel %vm61, 1, 0
    %v78 = vsel %vm62, 1, 0
    %v79 = vsel %vm63, 1, 0
    %v80 = vsel %vm64, 1, 0
    %v81 = vsel %vm65, 1, 0
    %v82 = vsel %vm66, 1, 0
    %v83 = vsel %vm67, 1, 0
    %v84 = vsel %vm68, 1, 0
    %v85 = vcvt.s32.f32 %v69
    %v86 = vcvt.s32.f32 %v70
    %v87 = vcvt.s32.f32 %v71
    %v88 = vcvt.s32.f32 %v72
    %v89 = vcvt.s32.f32 %v73
    %v90 = vcvt.s32.f32 %v74
    %v91 = vcvt.s32.f32 %v75
    %v92 = vcvt.s32.f32 %v76
    %v93 = vcvt.s32.f32 %v77
    %v94 = vcvt.s32.f32 %v78
    %v95 = vcvt.s32.f32 %v79
    %v96 = vcvt.s32.f32 %v80
    %v97 = vcvt.s32.f32 %v81
    %v98 = vcvt.s32.f32 %v82
    %v99 = vcvt.s32.f32 %v83
    %v100 = vcvt.s32.f32 %v84
    %v101 = vld [vmem:[#allocation2] sm:$0xff]
    %102 = vmatpush.msra.mxu0 %v100
    %103 = vmatpush.msra.mxu0 %v99
    %104 = vmatpush.msra.mxu0 %v98
    %105 = vmatpush.msra.mxu0 %v97
    %106 = vmatpush.msra.mxu0 %v96
    %107 = vmatpush.msra.mxu0 %v95
    %108 = vmatpush.msra.mxu0 %v94
    %109 = vmatpush.msra.mxu0 %v93
    %110 = vmatpush.msra.mxu0 %v92
    %111 = vmatpush.msra.mxu0 %v91
    %112 = vmatpush.msra.mxu0 %v90
    %113 = vmatpush.msra.mxu0 %v89
    %114 = vmatpush.msra.mxu0 %v88
    %115 = vmatpush.msra.mxu0 %v87
    %116 = vmatpush.msra.mxu0 %v86
    %117 = vmatpush.msra.mxu0 %v85
    %118 = vmatmul.f32.gmra.mxu0 %v101
    %v119 = vpop.f32.mrf.mxu0
    %v120 = vadd.f32 0.0, %v119
    %121 = vdwg.mxu0
    %v122 = vld [vmem:[%s1 + $0x1] sm:$0x1]
    %v123 = vperm.slane %v122, 0
    %vm124 = vcmp.eq.s32.totalorder %v35, %v123
    %vm125 = vcmp.eq.s32.totalorder %v36, %v123
    %vm126 = vcmp.eq.s32.totalorder %v37, %v123
    %vm127 = vcmp.eq.s32.totalorder %v38, %v123
    %vm128 = vcmp.eq.s32.totalorder %v39, %v123
    %vm129 = vcmp.eq.s32.totalorder %v40, %v123
    %vm130 = vcmp.eq.s32.totalorder %v41, %v123
    %vm131 = vcmp.eq.s32.totalorder %v42, %v123
    %vm132 = vcmp.eq.s32.totalorder %v43, %v123
    %vm133 = vcmp.eq.s32.totalorder %v44, %v123
    %vm134 = vcmp.eq.s32.totalorder %v45, %v123
    %vm135 = vcmp.eq.s32.totalorder %v46, %v123
    %vm136 = vcmp.eq.s32.totalorder %v47, %v123
    %vm137 = vcmp.eq.s32.totalorder %v48, %v123
    %vm138 = vcmp.eq.s32.totalorder %v49, %v123
    %vm139 = vcmp.eq.s32.totalorder %v50, %v123
    %v140 = vsel %vm124, 1, 0
    %v141 = vsel %vm125, 1, 0
    %v142 = vsel %vm126, 1, 0
    %v143 = vsel %vm127, 1, 0
    %v144 = vsel %vm128, 1, 0
    %v145 = vsel %vm129, 1, 0
    %v146 = vsel %vm130, 1, 0
    %v147 = vsel %vm131, 1, 0
    %v148 = vsel %vm132, 1, 0
    %v149 = vsel %vm133, 1, 0
    %v150 = vsel %vm134, 1, 0
    %v151 = vsel %vm135, 1, 0
    %v152 = vsel %vm136, 1, 0
    %v153 = vsel %vm137, 1, 0
    %v154 = vsel %vm138, 1, 0
    %v155 = vsel %vm139, 1, 0
    %v156 = vcvt.s32.f32 %v140
    %v157 = vcvt.s32.f32 %v141
    %v158 = vcvt.s32.f32 %v142
    %v159 = vcvt.s32.f32 %v143
    %v160 = vcvt.s32.f32 %v144
    %v161 = vcvt.s32.f32 %v145
    %v162 = vcvt.s32.f32 %v146
    %v163 = vcvt.s32.f32 %v147
    %v164 = vcvt.s32.f32 %v148
    %v165 = vcvt.s32.f32 %v149
    %v166 = vcvt.s32.f32 %v150
    %v167 = vcvt.s32.f32 %v151
    %v168 = vcvt.s32.f32 %v152
    %v169 = vcvt.s32.f32 %v153
    %v170 = vcvt.s32.f32 %v154
    %v171 = vcvt.s32.f32 %v155
    %s172 = scalar_lea.vmem [#allocation2], 8
    %v173 = vld [vmem:[%s172] sm:$0xff]
    %174 = vmatpush.msra.mxu0 %v171
    %175 = vmatpush.msra.mxu0 %v170
    %176 = vmatpush.msra.mxu0 %v169
    %177 = vmatpush.msra.mxu0 %v168
    %178 = vmatpush.msra.mxu0 %v167
    %179 = vmatpush.msra.mxu0 %v166
    %180 = vmatpush.msra.mxu0 %v165
    %181 = vmatpush.msra.mxu0 %v164
    %182 = vmatpush.msra.mxu0 %v163
    %183 = vmatpush.msra.mxu0 %v162
    %184 = vmatpush.msra.mxu0 %v161
    %185 = vmatpush.msra.mxu0 %v160
    %186 = vmatpush.msra.mxu0 %v159
    %187 = vmatpush.msra.mxu0 %v158
    %188 = vmatpush.msra.mxu0 %v157
    %189 = vmatpush.msra.mxu0 %v156
    %190 = vmatmul.f32.gmra.mxu0 %v173
    %v191 = vpop.f32.mrf.mxu0
    %v192 = vadd.f32 0.0, %v191
    %193 = vdwg.mxu0
    %v194 = vld [vmem:[%s1 + $0x2] sm:$0x1]
    %v195 = vperm.slane %v194, 0
    %vm196 = vcmp.eq.s32.totalorder %v35, %v195
    %vm197 = vcmp.eq.s32.totalorder %v36, %v195
    %vm198 = vcmp.eq.s32.totalorder %v37, %v195
    %vm199 = vcmp.eq.s32.totalorder %v38, %v195
    %vm200 = vcmp.eq.s32.totalorder %v39, %v195
    %vm201 = vcmp.eq.s32.totalorder %v40, %v195
    %vm202 = vcmp.eq.s32.totalorder %v41, %v195
    %vm203 = vcmp.eq.s32.totalorder %v42, %v195
    %vm204 = vcmp.eq.s32.totalorder %v43, %v195
    %vm205 = vcmp.eq.s32.totalorder %v44, %v195
    %vm206 = vcmp.eq.s32.totalorder %v45, %v195
    %vm207 = vcmp.eq.s32.totalorder %v46, %v195
    %vm208 = vcmp.eq.s32.totalorder %v47, %v195
    %vm209 = vcmp.eq.s32.totalorder %v48, %v195
    %vm210 = vcmp.eq.s32.totalorder %v49, %v195
    %vm211 = vcmp.eq.s32.totalorder %v50, %v195
    %v212 = vsel %vm196, 1, 0
    %v213 = vsel %vm197, 1, 0
    %v214 = vsel %vm198, 1, 0
    %v215 = vsel %vm199, 1, 0
    %v216 = vsel %vm200, 1, 0
    %v217 = vsel %vm201, 1, 0
    %v218 = vsel %vm202, 1, 0
    %v219 = vsel %vm203, 1, 0
    %v220 = vsel %vm204, 1, 0
    %v221 = vsel %vm205, 1, 0
    %v222 = vsel %vm206, 1, 0
    %v223 = vsel %vm207, 1, 0
    %v224 = vsel %vm208, 1, 0
    %v225 = vsel %vm209, 1, 0
    %v226 = vsel %vm210, 1, 0
    %v227 = vsel %vm211, 1, 0
    %v228 = vcvt.s32.f32 %v212
    %v229 = vcvt.s32.f32 %v213
    %v230 = vcvt.s32.f32 %v214
    %v231 = vcvt.s32.f32 %v215
    %v232 = vcvt.s32.f32 %v216
    %v233 = vcvt.s32.f32 %v217
    %v234 = vcvt.s32.f32 %v218
    %v235 = vcvt.s32.f32 %v219
    %v236 = vcvt.s32.f32 %v220
    %v237 = vcvt.s32.f32 %v221
    %v238 = vcvt.s32.f32 %v222
    %v239 = vcvt.s32.f32 %v223
    %v240 = vcvt.s32.f32 %v224
    %v241 = vcvt.s32.f32 %v225
    %v242 = vcvt.s32.f32 %v226
    %v243 = vcvt.s32.f32 %v227
    %s244 = scalar_lea.vmem [#allocation2], 16
    %v245 = vld [vmem:[%s244] sm:$0xff]
    %246 = vmatpush.msra.mxu0 %v243
    %247 = vmatpush.msra.mxu0 %v242
    %248 = vmatpush.msra.mxu0 %v241
    %249 = vmatpush.msra.mxu0 %v240
    %250 = vmatpush.msra.mxu0 %v239
    %251 = vmatpush.msra.mxu0 %v238
    %252 = vmatpush.msra.mxu0 %v237
    %253 = vmatpush.msra.mxu0 %v236
    %254 = vmatpush.msra.mxu0 %v235
    %255 = vmatpush.msra.mxu0 %v234
    %256 = vmatpush.msra.mxu0 %v233
    %257 = vmatpush.msra.mxu0 %v232
    %258 = vmatpush.msra.mxu0 %v231
    %259 = vmatpush.msra.mxu0 %v230
    %260 = vmatpush.msra.mxu0 %v229
    %261 = vmatpush.msra.mxu0 %v228
    %262 = vmatmul.f32.gmra.mxu0 %v245
    %v263 = vpop.f32.mrf.mxu0
    %v264 = vadd.f32 0.0, %v263
    %265 = vdwg.mxu0
    %v266 = vld [vmem:[%s1 + $0x3] sm:$0x1]
    %v267 = vperm.slane %v266, 0
    %vm268 = vcmp.eq.s32.totalorder %v35, %v267
    %vm269 = vcmp.eq.s32.totalorder %v36, %v267
    %vm270 = vcmp.eq.s32.totalorder %v37, %v267
    %vm271 = vcmp.eq.s32.totalorder %v38, %v267
    %vm272 = vcmp.eq.s32.totalorder %v39, %v267
    %vm273 = vcmp.eq.s32.totalorder %v40, %v267
    %vm274 = vcmp.eq.s32.totalorder %v41, %v267
    %vm275 = vcmp.eq.s32.totalorder %v42, %v267
    %vm276 = vcmp.eq.s32.totalorder %v43, %v267
    %vm277 = vcmp.eq.s32.totalorder %v44, %v267
    %vm278 = vcmp.eq.s32.totalorder %v45, %v267
    %vm279 = vcmp.eq.s32.totalorder %v46, %v267
    %vm280 = vcmp.eq.s32.totalorder %v47, %v267
    %vm281 = vcmp.eq.s32.totalorder %v48, %v267
    %vm282 = vcmp.eq.s32.totalorder %v49, %v267
    %vm283 = vcmp.eq.s32.totalorder %v50, %v267
    %v284 = vsel %vm268, 1, 0
    %v285 = vsel %vm269, 1, 0
    %v286 = vsel %vm270, 1, 0
    %v287 = vsel %vm271, 1, 0
    %v288 = vsel %vm272, 1, 0
    %v289 = vsel %vm273, 1, 0
    %v290 = vsel %vm274, 1, 0
    %v291 = vsel %vm275, 1, 0
    %v292 = vsel %vm276, 1, 0
    %v293 = vsel %vm277, 1, 0
    %v294 = vsel %vm278, 1, 0
    %v295 = vsel %vm279, 1, 0
    %v296 = vsel %vm280, 1, 0
    %v297 = vsel %vm281, 1, 0
    %v298 = vsel %vm282, 1, 0
    %v299 = vsel %vm283, 1, 0
    %v300 = vcvt.s32.f32 %v284
    %v301 = vcvt.s32.f32 %v285
    %v302 = vcvt.s32.f32 %v286
    %v303 = vcvt.s32.f32 %v287
    %v304 = vcvt.s32.f32 %v288
    %v305 = vcvt.s32.f32 %v289
    %v306 = vcvt.s32.f32 %v290
    %v307 = vcvt.s32.f32 %v291
    %v308 = vcvt.s32.f32 %v292
    %v309 = vcvt.s32.f32 %v293
    %v310 = vcvt.s32.f32 %v294
    %v311 = vcvt.s32.f32 %v295
    %v312 = vcvt.s32.f32 %v296
    %v313 = vcvt.s32.f32 %v297
    %v314 = vcvt.s32.f32 %v298
    %v315 = vcvt.s32.f32 %v299
    %s316 = scalar_lea.vmem [#allocation2], 24
    %v317 = vld [vmem:[%s316] sm:$0xff]
    %318 = vmatpush.msra.mxu0 %v315
    %319 = vmatpush.msra.mxu0 %v314
    %320 = vmatpush.msra.mxu0 %v313
    %321 = vmatpush.msra.mxu0 %v312
    %322 = vmatpush.msra.mxu0 %v311
    %323 = vmatpush.msra.mxu0 %v310
    %324 = vmatpush.msra.mxu0 %v309
    %325 = vmatpush.msra.mxu0 %v308
    %326 = vmatpush.msra.mxu0 %v307
    %327 = vmatpush.msra.mxu0 %v306
    %328 = vmatpush.msra.mxu0 %v305
    %329 = vmatpush.msra.mxu0 %v304
    %330 = vmatpush.msra.mxu0 %v303
    %331 = vmatpush.msra.mxu0 %v302
    %332 = vmatpush.msra.mxu0 %v301
    %333 = vmatpush.msra.mxu0 %v300
    %334 = vmatmul.f32.gmra.mxu0 %v317
    %v335 = vpop.f32.mrf.mxu0
    %v336 = vadd.f32 0.0, %v335
    %337 = vdwg.mxu0
    %v338 = vld [vmem:[%s1 + $0x4] sm:$0x1]
    %v339 = vperm.slane %v338, 0
    %vm340 = vcmp.eq.s32.totalorder %v35, %v339
    %vm341 = vcmp.eq.s32.totalorder %v36, %v339
    %vm342 = vcmp.eq.s32.totalorder %v37, %v339
    %vm343 = vcmp.eq.s32.totalorder %v38, %v339
    %vm344 = vcmp.eq.s32.totalorder %v39, %v339
    %vm345 = vcmp.eq.s32.totalorder %v40, %v339
    %vm346 = vcmp.eq.s32.totalorder %v41, %v339
    %vm347 = vcmp.eq.s32.totalorder %v42, %v339
    %vm348 = vcmp.eq.s32.totalorder %v43, %v339
    %vm349 = vcmp.eq.s32.totalorder %v44, %v339
    %vm350 = vcmp.eq.s32.totalorder %v45, %v339
    %vm351 = vcmp.eq.s32.totalorder %v46, %v339
    %vm352 = vcmp.eq.s32.totalorder %v47, %v339
    %vm353 = vcmp.eq.s32.totalorder %v48, %v339
    %vm354 = vcmp.eq.s32.totalorder %v49, %v339
    %vm355 = vcmp.eq.s32.totalorder %v50, %v339
    %v356 = vsel %vm340, 1, 0
    %v357 = vsel %vm341, 1, 0
    %v358 = vsel %vm342, 1, 0
    %v359 = vsel %vm343, 1, 0
    %v360 = vsel %vm344, 1, 0
    %v361 = vsel %vm345, 1, 0
    %v362 = vsel %vm346, 1, 0
    %v363 = vsel %vm347, 1, 0
    %v364 = vsel %vm348, 1, 0
    %v365 = vsel %vm349, 1, 0
    %v366 = vsel %vm350, 1, 0
    %v367 = vsel %vm351, 1, 0
    %v368 = vsel %vm352, 1, 0
    %v369 = vsel %vm353, 1, 0
    %v370 = vsel %vm354, 1, 0
    %v371 = vsel %vm355, 1, 0
    %v372 = vcvt.s32.f32 %v356
    %v373 = vcvt.s32.f32 %v357
    %v374 = vcvt.s32.f32 %v358
    %v375 = vcvt.s32.f32 %v359
    %v376 = vcvt.s32.f32 %v360
    %v377 = vcvt.s32.f32 %v361
    %v378 = vcvt.s32.f32 %v362
    %v379 = vcvt.s32.f32 %v363
    %v380 = vcvt.s32.f32 %v364
    %v381 = vcvt.s32.f32 %v365
    %v382 = vcvt.s32.f32 %v366
    %v383 = vcvt.s32.f32 %v367
    %v384 = vcvt.s32.f32 %v368
    %v385 = vcvt.s32.f32 %v369
    %v386 = vcvt.s32.f32 %v370
    %v387 = vcvt.s32.f32 %v371
    %s388 = scalar_lea.vmem [#allocation2], 32
    %v389 = vld [vmem:[%s388] sm:$0xff]
    %390 = vmatpush.msra.mxu0 %v387
    %391 = vmatpush.msra.mxu0 %v386
    %392 = vmatpush.msra.mxu0 %v385
    %393 = vmatpush.msra.mxu0 %v384
    %394 = vmatpush.msra.mxu0 %v383
    %395 = vmatpush.msra.mxu0 %v382
    %396 = vmatpush.msra.mxu0 %v381
    %397 = vmatpush.msra.mxu0 %v380
    %398 = vmatpush.msra.mxu0 %v379
    %399 = vmatpush.msra.mxu0 %v378
    %400 = vmatpush.msra.mxu0 %v377
    %401 = vmatpush.msra.mxu0 %v376
    %402 = vmatpush.msra.mxu0 %v375
    %403 = vmatpush.msra.mxu0 %v374
    %404 = vmatpush.msra.mxu0 %v373
    %405 = vmatpush.msra.mxu0 %v372
    %406 = vmatmul.f32.gmra.mxu0 %v389
    %v407 = vpop.f32.mrf.mxu0
    %v408 = vadd.f32 0.0, %v407
    %409 = vdwg.mxu0
    %v410 = vld [vmem:[%s1 + $0x5] sm:$0x1]
    %v411 = vperm.slane %v410, 0
    %vm412 = vcmp.eq.s32.totalorder %v35, %v411
    %vm413 = vcmp.eq.s32.totalorder %v36, %v411
    %vm414 = vcmp.eq.s32.totalorder %v37, %v411
    %vm415 = vcmp.eq.s32.totalorder %v38, %v411
    %vm416 = vcmp.eq.s32.totalorder %v39, %v411
    %vm417 = vcmp.eq.s32.totalorder %v40, %v411
    %vm418 = vcmp.eq.s32.totalorder %v41, %v411
    %vm419 = vcmp.eq.s32.totalorder %v42, %v411
    %vm420 = vcmp.eq.s32.totalorder %v43, %v411
    %vm421 = vcmp.eq.s32.totalorder %v44, %v411
    %vm422 = vcmp.eq.s32.totalorder %v45, %v411
    %vm423 = vcmp.eq.s32.totalorder %v46, %v411
    %vm424 = vcmp.eq.s32.totalorder %v47, %v411
    %vm425 = vcmp.eq.s32.totalorder %v48, %v411
    %vm426 = vcmp.eq.s32.totalorder %v49, %v411
    %vm427 = vcmp.eq.s32.totalorder %v50, %v411
    %v428 = vsel %vm412, 1, 0
    %v429 = vsel %vm413, 1, 0
    %v430 = vsel %vm414, 1, 0
    %v431 = vsel %vm415, 1, 0
    %v432 = vsel %vm416, 1, 0
    %v433 = vsel %vm417, 1, 0
    %v434 = vsel %vm418, 1, 0
    %v435 = vsel %vm419, 1, 0
    %v436 = vsel %vm420, 1, 0
    %v437 = vsel %vm421, 1, 0
    %v438 = vsel %vm422, 1, 0
    %v439 = vsel %vm423, 1, 0
    %v440 = vsel %vm424, 1, 0
    %v441 = vsel %vm425, 1, 0
    %v442 = vsel %vm426, 1, 0
    %v443 = vsel %vm427, 1, 0
    %v444 = vcvt.s32.f32 %v428
    %v445 = vcvt.s32.f32 %v429
    %v446 = vcvt.s32.f32 %v430
    %v447 = vcvt.s32.f32 %v431
    %v448 = vcvt.s32.f32 %v432
    %v449 = vcvt.s32.f32 %v433
    %v450 = vcvt.s32.f32 %v434
    %v451 = vcvt.s32.f32 %v435
    %v452 = vcvt.s32.f32 %v436
    %v453 = vcvt.s32.f32 %v437
    %v454 = vcvt.s32.f32 %v438
    %v455 = vcvt.s32.f32 %v439
    %v456 = vcvt.s32.f32 %v440
    %v457 = vcvt.s32.f32 %v441
    %v458 = vcvt.s32.f32 %v442
    %v459 = vcvt.s32.f32 %v443
    %s460 = scalar_lea.vmem [#allocation2], 40
    %v461 = vld [vmem:[%s460] sm:$0xff]
    %462 = vmatpush.msra.mxu0 %v459
    %463 = vmatpush.msra.mxu0 %v458
    %464 = vmatpush.msra.mxu0 %v457
    %465 = vmatpush.msra.mxu0 %v456
    %466 = vmatpush.msra.mxu0 %v455
    %467 = vmatpush.msra.mxu0 %v454
    %468 = vmatpush.msra.mxu0 %v453
    %469 = vmatpush.msra.mxu0 %v452
    %470 = vmatpush.msra.mxu0 %v451
    %471 = vmatpush.msra.mxu0 %v450
    %472 = vmatpush.msra.mxu0 %v449
    %473 = vmatpush.msra.mxu0 %v448
    %474 = vmatpush.msra.mxu0 %v447
    %475 = vmatpush.msra.mxu0 %v446
    %476 = vmatpush.msra.mxu0 %v445
    %477 = vmatpush.msra.mxu0 %v444
    %478 = vmatmul.f32.gmra.mxu0 %v461
    %v479 = vpop.f32.mrf.mxu0
    %v480 = vadd.f32 0.0, %v479
    %481 = vdwg.mxu0
    %v482 = vld [vmem:[%s1 + $0x6] sm:$0x1]
    %v483 = vperm.slane %v482, 0
    %vm484 = vcmp.eq.s32.totalorder %v35, %v483
    %vm485 = vcmp.eq.s32.totalorder %v36, %v483
    %vm486 = vcmp.eq.s32.totalorder %v37, %v483
    %vm487 = vcmp.eq.s32.totalorder %v38, %v483
    %vm488 = vcmp.eq.s32.totalorder %v39, %v483
    %vm489 = vcmp.eq.s32.totalorder %v40, %v483
    %vm490 = vcmp.eq.s32.totalorder %v41, %v483
    %vm491 = vcmp.eq.s32.totalorder %v42, %v483
    %vm492 = vcmp.eq.s32.totalorder %v43, %v483
    %vm493 = vcmp.eq.s32.totalorder %v44, %v483
    %vm494 = vcmp.eq.s32.totalorder %v45, %v483
    %vm495 = vcmp.eq.s32.totalorder %v46, %v483
    %vm496 = vcmp.eq.s32.totalorder %v47, %v483
    %vm497 = vcmp.eq.s32.totalorder %v48, %v483
    %vm498 = vcmp.eq.s32.totalorder %v49, %v483
    %vm499 = vcmp.eq.s32.totalorder %v50, %v483
    %v500 = vsel %vm484, 1, 0
    %v501 = vsel %vm485, 1, 0
    %v502 = vsel %vm486, 1, 0
    %v503 = vsel %vm487, 1, 0
    %v504 = vsel %vm488, 1, 0
    %v505 = vsel %vm489, 1, 0
    %v506 = vsel %vm490, 1, 0
    %v507 = vsel %vm491, 1, 0
    %v508 = vsel %vm492, 1, 0
    %v509 = vsel %vm493, 1, 0
    %v510 = vsel %vm494, 1, 0
    %v511 = vsel %vm495, 1, 0
    %v512 = vsel %vm496, 1, 0
    %v513 = vsel %vm497, 1, 0
    %v514 = vsel %vm498, 1, 0
    %v515 = vsel %vm499, 1, 0
    %v516 = vcvt.s32.f32 %v500
    %v517 = vcvt.s32.f32 %v501
    %v518 = vcvt.s32.f32 %v502
    %v519 = vcvt.s32.f32 %v503
    %v520 = vcvt.s32.f32 %v504
    %v521 = vcvt.s32.f32 %v505
    %v522 = vcvt.s32.f32 %v506
    %v523 = vcvt.s32.f32 %v507
    %v524 = vcvt.s32.f32 %v508
    %v525 = vcvt.s32.f32 %v509
    %v526 = vcvt.s32.f32 %v510
    %v527 = vcvt.s32.f32 %v511
    %v528 = vcvt.s32.f32 %v512
    %v529 = vcvt.s32.f32 %v513
    %v530 = vcvt.s32.f32 %v514
    %v531 = vcvt.s32.f32 %v515
    %s532 = scalar_lea.vmem [#allocation2], 48
    %v533 = vld [vmem:[%s532] sm:$0xff]
    %534 = vmatpush.msra.mxu0 %v531
    %535 = vmatpush.msra.mxu0 %v530
    %536 = vmatpush.msra.mxu0 %v529
    %537 = vmatpush.msra.mxu0 %v528
    %538 = vmatpush.msra.mxu0 %v527
    %539 = vmatpush.msra.mxu0 %v526
    %540 = vmatpush.msra.mxu0 %v525
    %541 = vmatpush.msra.mxu0 %v524
    %542 = vmatpush.msra.mxu0 %v523
    %543 = vmatpush.msra.mxu0 %v522
    %544 = vmatpush.msra.mxu0 %v521
    %545 = vmatpush.msra.mxu0 %v520
    %546 = vmatpush.msra.mxu0 %v519
    %547 = vmatpush.msra.mxu0 %v518
    %548 = vmatpush.msra.mxu0 %v517
    %549 = vmatpush.msra.mxu0 %v516
    %550 = vmatmul.f32.gmra.mxu0 %v533
    %v551 = vpop.f32.mrf.mxu0
    %v552 = vadd.f32 0.0, %v551
    %553 = vdwg.mxu0
    %v554 = vld [vmem:[%s1 + $0x7] sm:$0x1]
    %v555 = vperm.slane %v554, 0
    %vm556 = vcmp.eq.s32.totalorder %v35, %v555
    %vm557 = vcmp.eq.s32.totalorder %v36, %v555
    %vm558 = vcmp.eq.s32.totalorder %v37, %v555
    %vm559 = vcmp.eq.s32.totalorder %v38, %v555
    %vm560 = vcmp.eq.s32.totalorder %v39, %v555
    %vm561 = vcmp.eq.s32.totalorder %v40, %v555
    %vm562 = vcmp.eq.s32.totalorder %v41, %v555
    %vm563 = vcmp.eq.s32.totalorder %v42, %v555
    %vm564 = vcmp.eq.s32.totalorder %v43, %v555
    %vm565 = vcmp.eq.s32.totalorder %v44, %v555
    %vm566 = vcmp.eq.s32.totalorder %v45, %v555
    %vm567 = vcmp.eq.s32.totalorder %v46, %v555
    %vm568 = vcmp.eq.s32.totalorder %v47, %v555
    %vm569 = vcmp.eq.s32.totalorder %v48, %v555
    %vm570 = vcmp.eq.s32.totalorder %v49, %v555
    %vm571 = vcmp.eq.s32.totalorder %v50, %v555
    %v572 = vsel %vm556, 1, 0
    %v573 = vsel %vm557, 1, 0
    %v574 = vsel %vm558, 1, 0
    %v575 = vsel %vm559, 1, 0
    %v576 = vsel %vm560, 1, 0
    %v577 = vsel %vm561, 1, 0
    %v578 = vsel %vm562, 1, 0
    %v579 = vsel %vm563, 1, 0
    %v580 = vsel %vm564, 1, 0
    %v581 = vsel %vm565, 1, 0
    %v582 = vsel %vm566, 1, 0
    %v583 = vsel %vm567, 1, 0
    %v584 = vsel %vm568, 1, 0
    %v585 = vsel %vm569, 1, 0
    %v586 = vsel %vm570, 1, 0
    %v587 = vsel %vm571, 1, 0
    %v588 = vcvt.s32.f32 %v572
    %v589 = vcvt.s32.f32 %v573
    %v590 = vcvt.s32.f32 %v574
    %v591 = vcvt.s32.f32 %v575
    %v592 = vcvt.s32.f32 %v576
    %v593 = vcvt.s32.f32 %v577
    %v594 = vcvt.s32.f32 %v578
    %v595 = vcvt.s32.f32 %v579
    %v596 = vcvt.s32.f32 %v580
    %v597 = vcvt.s32.f32 %v581
    %v598 = vcvt.s32.f32 %v582
    %v599 = vcvt.s32.f32 %v583
    %v600 = vcvt.s32.f32 %v584
    %v601 = vcvt.s32.f32 %v585
    %v602 = vcvt.s32.f32 %v586
    %v603 = vcvt.s32.f32 %v587
    %s604 = scalar_lea.vmem [#allocation2], 56
    %v605 = vld [vmem:[%s604] sm:$0xff]
    %606 = vmatpush.msra.mxu0 %v603
    %607 = vmatpush.msra.mxu0 %v602
    %608 = vmatpush.msra.mxu0 %v601
    %609 = vmatpush.msra.mxu0 %v600
    %610 = vmatpush.msra.mxu0 %v599
    %611 = vmatpush.msra.mxu0 %v598
    %612 = vmatpush.msra.mxu0 %v597
    %613 = vmatpush.msra.mxu0 %v596
    %614 = vmatpush.msra.mxu0 %v595
    %615 = vmatpush.msra.mxu0 %v594
    %616 = vmatpush.msra.mxu0 %v593
    %617 = vmatpush.msra.mxu0 %v592
    %618 = vmatpush.msra.mxu0 %v591
    %619 = vmatpush.msra.mxu0 %v590
    %620 = vmatpush.msra.mxu0 %v589
    %621 = vmatpush.msra.mxu0 %v588
    %622 = vmatmul.f32.gmra.mxu0 %v605
    %v623 = vpop.f32.mrf.mxu0
    %v624 = vadd.f32 0.0, %v623
    %625 = vdwg.mxu0
    %vm626 = vcmp.eq.s32.totalorder %v35, 1
    %vm627 = vcmp.eq.s32.totalorder %v35, 2
    %vm628 = vcmp.eq.s32.totalorder %v35, 3
    %vm629 = vcmp.eq.s32.totalorder %v35, 4
    %vm630 = vcmp.eq.s32.totalorder %v35, 5
    %vm631 = vcmp.eq.s32.totalorder %v35, 6
    %vm632 = vcmp.eq.s32.totalorder %v35, 7
    %v633 = vperm.slane %v120, 0
    %v634 = vperm.slane %v192, 0
    %v635 = vsel %vm626, %v634, %v633
    %v636 = vperm.slane %v264, 0
    %v637 = vsel %vm627, %v636, %v635
    %v638 = vperm.slane %v336, 0
    %v639 = vsel %vm628, %v638, %v637
    %v640 = vperm.slane %v408, 0
    %v641 = vsel %vm629, %v640, %v639
    %v642 = vperm.slane %v480, 0
    %v643 = vsel %vm630, %v642, %v641
    %v644 = vperm.slane %v552, 0
    %v645 = vsel %vm631, %v644, %v643
    %v646 = vperm.slane %v624, 0
    %v647 = vsel %vm632, %v646, %v645
    %v648 = vperm.slane %v120, 1
    %v649 = vperm.slane %v192, 1
    %v650 = vsel %vm626, %v649, %v648
    %v651 = vperm.slane %v264, 1
    %v652 = vsel %vm627, %v651, %v650
    %v653 = vperm.slane %v336, 1
    %v654 = vsel %vm628, %v653, %v652
    %v655 = vperm.slane %v408, 1
    %v656 = vsel %vm629, %v655, %v654
    %v657 = vperm.slane %v480, 1
    %v658 = vsel %vm630, %v657, %v656
    %v659 = vperm.slane %v552, 1
    %v660 = vsel %vm631, %v659, %v658
    %v661 = vperm.slane %v624, 1
    %v662 = vsel %vm632, %v661, %v660
    %v663 = vperm.slane %v120, 2
    %v664 = vperm.slane %v192, 2
    %v665 = vsel %vm626, %v664, %v663
    %v666 = vperm.slane %v264, 2
    %v667 = vsel %vm627, %v666, %v665
    %v668 = vperm.slane %v336, 2
    %v669 = vsel %vm628, %v668, %v667
    %v670 = vperm.slane %v408, 2
    %v671 = vsel %vm629, %v670, %v669
    %v672 = vperm.slane %v480, 2
    %v673 = vsel %vm630, %v672, %v671
    %v674 = vperm.slane %v552, 2
    %v675 = vsel %vm631, %v674, %v673
    %v676 = vperm.slane %v624, 2
    %v677 = vsel %vm632, %v676, %v675
    %v678 = vperm.slane %v120, 3
    %v679 = vperm.slane %v192, 3
    %v680 = vsel %vm626, %v679, %v678
    %v681 = vperm.slane %v264, 3
    %v682 = vsel %vm627, %v681, %v680
    %v683 = vperm.slane %v336, 3
    %v684 = vsel %vm628, %v683, %v682
    %v685 = vperm.slane %v408, 3
    %v686 = vsel %vm629, %v685, %v684
    %v687 = vperm.slane %v480, 3
    %v688 = vsel %vm630, %v687, %v686
    %v689 = vperm.slane %v552, 3
    %v690 = vsel %vm631, %v689, %v688
    %v691 = vperm.slane %v624, 3
    %v692 = vsel %vm632, %v691, %v690
    %v693 = vperm.slane %v120, 4
    %v694 = vperm.slane %v192, 4
    %v695 = vsel %vm626, %v694, %v693
    %v696 = vperm.slane %v264, 4
    %v697 = vsel %vm627, %v696, %v695
    %v698 = vperm.slane %v336, 4
    %v699 = vsel %vm628, %v698, %v697
    %v700 = vperm.slane %v408, 4
    %v701 = vsel %vm629, %v700, %v699
    %v702 = vperm.slane %v480, 4
    %v703 = vsel %vm630, %v702, %v701
    %v704 = vperm.slane %v552, 4
    %v705 = vsel %vm631, %v704, %v703
    %v706 = vperm.slane %v624, 4
    %v707 = vsel %vm632, %v706, %v705
    %v708 = vperm.slane %v120, 5
    %v709 = vperm.slane %v192, 5
    %v710 = vsel %vm626, %v709, %v708
    %v711 = vperm.slane %v264, 5
    %v712 = vsel %vm627, %v711, %v710
    %v713 = vperm.slane %v336, 5
    %v714 = vsel %vm628, %v713, %v712
    %v715 = vperm.slane %v408, 5
    %v716 = vsel %vm629, %v715, %v714
    %v717 = vperm.slane %v480, 5
    %v718 = vsel %vm630, %v717, %v716
    %v719 = vperm.slane %v552, 5
    %v720 = vsel %vm631, %v719, %v718
    %v721 = vperm.slane %v624, 5
    %v722 = vsel %vm632, %v721, %v720
    %v723 = vperm.slane %v120, 6
    %v724 = vperm.slane %v192, 6
    %v725 = vsel %vm626, %v724, %v723
    %v726 = vperm.slane %v264, 6
    %v727 = vsel %vm627, %v726, %v725
    %v728 = vperm.slane %v336, 6
    %v729 = vsel %vm628, %v728, %v727
    %v730 = vperm.slane %v408, 6
    %v731 = vsel %vm629, %v730, %v729
    %v732 = vperm.slane %v480, 6
    %v733 = vsel %vm630, %v732, %v731
    %v734 = vperm.slane %v552, 6
    %v735 = vsel %vm631, %v734, %v733
    %v736 = vperm.slane %v624, 6
    %v737 = vsel %vm632, %v736, %v735
    %v738 = vperm.slane %v120, 7
    %v739 = vperm.slane %v192, 7
    %v740 = vsel %vm626, %v739, %v738
    %v741 = vperm.slane %v264, 7
    %v742 = vsel %vm627, %v741, %v740
    %v743 = vperm.slane %v336, 7
    %v744 = vsel %vm628, %v743, %v742
    %v745 = vperm.slane %v408, 7
    %v746 = vsel %vm629, %v745, %v744
    %v747 = vperm.slane %v480, 7
    %v748 = vsel %vm630, %v747, %v746
    %v749 = vperm.slane %v552, 7
    %v750 = vsel %vm631, %v749, %v748
    %v751 = vperm.slane %v624, 7
    %v752 = vsel %vm632, %v751, %v750
    %v753 = vlaneseq
    %v754 = vand.u32 %v753, 127
    %v755 = vld [vmem:[%s1] sm:$0xff]
    %v756 = vld [vmem:[%s2] sm:$0xff]
    %v757 = vld [vmem:[%s3] sm:$0xff]
    %v758 = vmul.u32 %v757, 2
    %v759 = vadd.s32 %v758, 1
    %760 = vset.pattern.permute.xlu0 0
    %761 = vperm.xlu0 %760, %v759
    %v762 = vpop.permute.xlu0 %761
    %vm763 = vcmp.lt.s32.totalorder %v754, %v762
    %v764 = vsel %vm763, 0.0, -inf
    %vm765 = vcmp.ge.s32.totalorder %v754, 1
    %v766 = vsel %vm765, 0.0, -inf
    %vm767 = vcmp.ge.s32.totalorder %v754, 2
    %vm768 = vcmp.ne.s32.totalorder %v755, 0
    %v769 = vsel %vm767, 1, 0
    %vm770 = vcmp.eq.s32.totalorder %v769, 1
    %vm771 = vmand %vm770, %vm768
    %772 = vrot.lane.b32.xlu0 %v755, 2
    %v773 = vpop.permute.xlu0 %772
    %vm774 = vcmp.ne.s32.totalorder %v755, %v773
    %vm775 = vmand %vm771, %vm774
    %v776 = vsel %vm775, 0.0, -inf
    %vm777 = vcmp.lt.s32.totalorder %v759, 2
    %v778 = vsel %vm777, %v759, 2
    %779 = vset.pattern.permute.xlu0 0
    %780 = vperm.xlu0 %779, %v778
    %v781 = vpop.permute.xlu0 %780
    %vm782 = vcmp.lt.s32.totalorder %v754, %v781
    %v783 = vsel %vm782, %v647, -inf
    %784 = vrot.lane.b32.xlu0 %v783, 1
    %v785 = vpop.permute.xlu0 %784
    %v786 = vadd.f32 %v785, %v766
    %787 = vrot.lane.b32.xlu0 %v783, 2
    %v788 = vpop.permute.xlu0 %787
    %v789 = vadd.f32 %v788, %v776
    %v790 = vmax.f32 %v783, %v786
    %v791 = vmax.f32 %v790, %v789
    %vm792 = vcmp.eq.f32.partialorder %v791, -inf
    %v793 = vsel %vm792, 0.0, %v791
    %v794 = vsub.f32 %v783, %v793
    %v795 = vmul.f32 %v794, 1.442695
    %v796 = vpow.pop %v795
    %v797 = vsub.f32 %v786, %v793
    %v798 = vmul.f32 %v797, 1.442695
    %v799 = vpow.pop %v798
    %v800 = vadd.f32 %v796, %v799
    %v801 = vsub.f32 %v789, %v793
    %v802 = vmul.f32 %v801, 1.442695
    %v803 = vpow.pop %v802
    %v804 = vadd.f32 %v800, %v803
    %v805 = vlog2.pop %v804
    %v806 = vmul.f32 %v805, 0.6931472
    %v807 = vadd.f32 %v793, %v806
    %v808 = vadd.f32 %v662, %v807
    %v809 = vadd.f32 %v808, %v764
    %vm810 = vcmp.gt.s32.totalorder %v756, 1
    %v811 = vsel %vm810, 1, 0
    %812 = vset.pattern.permute.xlu0 0
    %813 = vperm.xlu0 %812, %v811
    %v814 = vpop.permute.xlu0 %813
    %vm815 = vcmp.eq.s32.totalorder %v814, 1
    %v816 = vsel %vm815, %v809, %v783
    %817 = vrot.lane.b32.xlu0 %v816, 1
    %v818 = vpop.permute.xlu0 %817
    %v819 = vadd.f32 %v818, %v766
    %820 = vrot.lane.b32.xlu0 %v816, 2
    %v821 = vpop.permute.xlu0 %820
    %v822 = vadd.f32 %v821, %v776
    %v823 = vmax.f32 %v816, %v819
    %v824 = vmax.f32 %v823, %v822
    %vm825 = vcmp.eq.f32.partialorder %v824, -inf
    %v826 = vsel %vm825, 0.0, %v824
    %v827 = vsub.f32 %v816, %v826
    %v828 = vmul.f32 %v827, 1.442695
    %v829 = vpow.pop %v828
    %v830 = vsub.f32 %v819, %v826
    %v831 = vmul.f32 %v830, 1.442695
    %v832 = vpow.pop %v831
    %v833 = vadd.f32 %v829, %v832
    %v834 = vsub.f32 %v822, %v826
    %v835 = vmul.f32 %v834, 1.442695
    %v836 = vpow.pop %v835
    %v837 = vadd.f32 %v833, %v836
    %v838 = vlog2.pop %v837
    %v839 = vmul.f32 %v838, 0.6931472
    %v840 = vadd.f32 %v826, %v839
    %v841 = vadd.f32 %v677, %v840
    %v842 = vadd.f32 %v841, %v764
    %vm843 = vcmp.gt.s32.totalorder %v756, 2
    %v844 = vsel %vm843, 1, 0
    %845 = vset.pattern.permute.xlu0 0
    %846 = vperm.xlu0 %845, %v844
    %v847 = vpop.permute.xlu0 %846
    %vm848 = vcmp.eq.s32.totalorder %v847, 1
    %v849 = vsel %vm848, %v842, %v816
    %850 = vrot.lane.b32.xlu0 %v849, 1
    %v851 = vpop.permute.xlu0 %850
    %v852 = vadd.f32 %v851, %v766
    %853 = vrot.lane.b32.xlu0 %v849, 2
    %v854 = vpop.permute.xlu0 %853
    %v855 = vadd.f32 %v854, %v776
    %v856 = vmax.f32 %v849, %v852
    %v857 = vmax.f32 %v856, %v855
    %vm858 = vcmp.eq.f32.partialorder %v857, -inf
    %v859 = vsel %vm858, 0.0, %v857
    %v860 = vsub.f32 %v849, %v859
    %v861 = vmul.f32 %v860, 1.442695
    %v862 = vpow.pop %v861
    %v863 = vsub.f32 %v852, %v859
    %v864 = vmul.f32 %v863, 1.442695
    %v865 = vpow.pop %v864
    %v866 = vadd.f32 %v862, %v865
    %v867 = vsub.f32 %v855, %v859
    %v868 = vmul.f32 %v867, 1.442695
    %v869 = vpow.pop %v868
    %v870 = vadd.f32 %v866, %v869
    %v871 = vlog2.pop %v870
    %v872 = vmul.f32 %v871, 0.6931472
    %v873 = vadd.f32 %v859, %v872
    %v874 = vadd.f32 %v692, %v873
    %v875 = vadd.f32 %v874, %v764
    %vm876 = vcmp.gt.s32.totalorder %v756, 3
    %v877 = vsel %vm876, 1, 0
    %878 = vset.pattern.permute.xlu0 0
    %879 = vperm.xlu0 %878, %v877
    %v880 = vpop.permute.xlu0 %879
    %vm881 = vcmp.eq.s32.totalorder %v880, 1
    %v882 = vsel %vm881, %v875, %v849
    %883 = vrot.lane.b32.xlu0 %v882, 1
    %v884 = vpop.permute.xlu0 %883
    %v885 = vadd.f32 %v884, %v766
    %886 = vrot.lane.b32.xlu0 %v882, 2
    %v887 = vpop.permute.xlu0 %886
    %v888 = vadd.f32 %v887, %v776
    %v889 = vmax.f32 %v882, %v885
    %v890 = vmax.f32 %v889, %v888
    %vm891 = vcmp.eq.f32.partialorder %v890, -inf
    %v892 = vsel %vm891, 0.0, %v890
    %v893 = vsub.f32 %v882, %v892
    %v894 = vmul.f32 %v893, 1.442695
    %v895 = vpow.pop %v894
    %v896 = vsub.f32 %v885, %v892
    %v897 = vmul.f32 %v896, 1.442695
    %v898 = vpow.pop %v897
    %v899 = vadd.f32 %v895, %v898
    %v900 = vsub.f32 %v888, %v892
    %v901 = vmul.f32 %v900, 1.442695
    %v902 = vpow.pop %v901
    %v903 = vadd.f32 %v899, %v902
    %v904 = vlog2.pop %v903
    %v905 = vmul.f32 %v904, 0.6931472
    %v906 = vadd.f32 %v892, %v905
    %v907 = vadd.f32 %v707, %v906
    %v908 = vadd.f32 %v907, %v764
    %vm909 = vcmp.gt.s32.totalorder %v756, 4
    %v910 = vsel %vm909, 1, 0
    %911 = vset.pattern.permute.xlu0 0
    %912 = vperm.xlu0 %911, %v910
    %v913 = vpop.permute.xlu0 %912
    %vm914 = vcmp.eq.s32.totalorder %v913, 1
    %v915 = vsel %vm914, %v908, %v882
    %916 = vrot.lane.b32.xlu0 %v915, 1
    %v917 = vpop.permute.xlu0 %916
    %v918 = vadd.f32 %v917, %v766
    %919 = vrot.lane.b32.xlu0 %v915, 2
    %v920 = vpop.permute.xlu0 %919
    %v921 = vadd.f32 %v920, %v776
    %v922 = vmax.f32 %v915, %v918
    %v923 = vmax.f32 %v922, %v921
    %vm924 = vcmp.eq.f32.partialorder %v923, -inf
    %v925 = vsel %vm924, 0.0, %v923
    %v926 = vsub.f32 %v915, %v925
    %v927 = vmul.f32 %v926, 1.442695
    %v928 = vpow.pop %v927
    %v929 = vsub.f32 %v918, %v925
    %v930 = vmul.f32 %v929, 1.442695
    %v931 = vpow.pop %v930
    %v932 = vadd.f32 %v928, %v931
    %v933 = vsub.f32 %v921, %v925
    %v934 = vmul.f32 %v933, 1.442695
    %v935 = vpow.pop %v934
    %v936 = vadd.f32 %v932, %v935
    %v937 = vlog2.pop %v936
    %v938 = vmul.f32 %v937, 0.6931472
    %v939 = vadd.f32 %v925, %v938
    %v940 = vadd.f32 %v722, %v939
    %v941 = vadd.f32 %v940, %v764
    %vm942 = vcmp.gt.s32.totalorder %v756, 5
    %v943 = vsel %vm942, 1, 0
    %944 = vset.pattern.permute.xlu0 0
    %945 = vperm.xlu0 %944, %v943
    %v946 = vpop.permute.xlu0 %945
    %vm947 = vcmp.eq.s32.totalorder %v946, 1
    %v948 = vsel %vm947, %v941, %v915
    %949 = vrot.lane.b32.xlu0 %v948, 1
    %v950 = vpop.permute.xlu0 %949
    %v951 = vadd.f32 %v950, %v766
    %952 = vrot.lane.b32.xlu0 %v948, 2
    %v953 = vpop.permute.xlu0 %952
    %v954 = vadd.f32 %v953, %v776
    %v955 = vmax.f32 %v948, %v951
    %v956 = vmax.f32 %v955, %v954
    %vm957 = vcmp.eq.f32.partialorder %v956, -inf
    %v958 = vsel %vm957, 0.0, %v956
    %v959 = vsub.f32 %v948, %v958
    %v960 = vmul.f32 %v959, 1.442695
    %v961 = vpow.pop %v960
    %v962 = vsub.f32 %v951, %v958
    %v963 = vmul.f32 %v962, 1.442695
    %v964 = vpow.pop %v963
    %v965 = vadd.f32 %v961, %v964
    %v966 = vsub.f32 %v954, %v958
    %v967 = vmul.f32 %v966, 1.442695
    %v968 = vpow.pop %v967
    %v969 = vadd.f32 %v965, %v968
    %v970 = vlog2.pop %v969
    %v971 = vmul.f32 %v970, 0.6931472
    %v972 = vadd.f32 %v958, %v971
    %v973 = vadd.f32 %v737, %v972
    %v974 = vadd.f32 %v973, %v764
    %vm975 = vcmp.gt.s32.totalorder %v756, 6
    %v976 = vsel %vm975, 1, 0
    %977 = vset.pattern.permute.xlu0 0
    %978 = vperm.xlu0 %977, %v976
    %v979 = vpop.permute.xlu0 %978
    %vm980 = vcmp.eq.s32.totalorder %v979, 1
    %v981 = vsel %vm980, %v974, %v948
    %982 = vrot.lane.b32.xlu0 %v981, 1
    %v983 = vpop.permute.xlu0 %982
    %v984 = vadd.f32 %v983, %v766
    %985 = vrot.lane.b32.xlu0 %v981, 2
    %v986 = vpop.permute.xlu0 %985
    %v987 = vadd.f32 %v986, %v776
    %v988 = vmax.f32 %v981, %v984
    %v989 = vmax.f32 %v988, %v987
    %vm990 = vcmp.eq.f32.partialorder %v989, -inf
    %v991 = vsel %vm990, 0.0, %v989
    %v992 = vsub.f32 %v981, %v991
    %v993 = vmul.f32 %v992, 1.442695
    %v994 = vpow.pop %v993
    %v995 = vsub.f32 %v984, %v991
    %v996 = vmul.f32 %v995, 1.442695
    %v997 = vpow.pop %v996
    %v998 = vadd.f32 %v994, %v997
    %v999 = vsub.f32 %v987, %v991
    %v1000 = vmul.f32 %v999, 1.442695
    %v1001 = vpow.pop %v1000
    %v1002 = vadd.f32 %v998, %v1001
    %v1003 = vlog2.pop %v1002
    %v1004 = vmul.f32 %v1003, 0.6931472
    %v1005 = vadd.f32 %v991, %v1004
    %v1006 = vadd.f32 %v752, %v1005
    %v1007 = vadd.f32 %v1006, %v764
    %vm1008 = vcmp.gt.s32.totalorder %v756, 7
    %v1009 = vsel %vm1008, 1, 0
    %1010 = vset.pattern.permute.xlu0 0
    %1011 = vperm.xlu0 %1010, %v1009
    %v1012 = vpop.permute.xlu0 %1011
    %vm1013 = vcmp.eq.s32.totalorder %v1012, 1
    %v1014 = vsel %vm1013, %v1007, %v981
    %1015 = vset.pattern.permute.xlu0 0
    %1016 = vperm.xlu0 %1015, %v758
    %v1017 = vpop.permute.xlu0 %1016
    %vm1018 = vcmp.eq.s32.totalorder %v754, %v1017
    %v1019 = vsel %vm1018, %v1014, -inf
    %1020 = vmax.xlane.f32.xlu0 %v1019
    %v1021 = vpop.xlane.xlu0 %1020
    %v1022 = vsub.s32 %v759, 2
    %1023 = vset.pattern.permute.xlu0 0
    %1024 = vperm.xlu0 %1023, %v1022
    %v1025 = vpop.permute.xlu0 %1024
    %vm1026 = vcmp.eq.s32.totalorder %v754, %v1025
    %v1027 = vsel %vm1026, %v1014, -inf
    %1028 = vmax.xlane.f32.xlu0 %v1027
    %v1029 = vpop.xlane.xlu0 %1028
    %v1030 = vmax.f32 %v1021, %v1029
    %vm1031 = vcmp.eq.f32.partialorder %v1030, -inf
    %v1032 = vsel %vm1031, 0.0, %v1030
    %v1033 = vsub.f32 %v1021, %v1032
    %v1034 = vmul.f32 %v1033, 1.442695
    %v1035 = vpow.pop %v1034
    %v1036 = vsub.f32 %v1029, %v1032
    %v1037 = vmul.f32 %v1036, 1.442695
    %v1038 = vpow.pop %v1037
    %v1039 = vadd.f32 %v1035, %v1038
    %v1040 = vlog2.pop %v1039
    %v1041 = vmul.f32 %v1040, 0.6931472
    %v1042 = vadd.f32 %v1032, %v1041
    %v1043 = vsub.f32 0.0, %v1042
    %vm1044 = vcmp.gt.s32.totalorder %v757, 1
    %v1045 = vsel %vm1044, %v757, 1
    %v1046 = vcvt.s32.f32 %v1045
    %v1047 = vrcp.pop %v1046
    %v1048 = vmul.f32 %v1046, %v1047
    %v1049 = vsub.f32 1.0, %v1048
    %v1050 = vmul.f32 %v1047, %v1049
    %v1051 = vadd.f32 %v1047, %v1050
    %vm1052 = vweird.f32 %v1046
    %vm1053 = vweird.f32 %v1047
    %vm1054 = vmor %vm1052, %vm1053
    %v1055 = vsel %vm1054, %v1047, %v1051
    %v1056 = vand.u32 2147483647, %v1046
    %vm1057 = vcmp.eq.f32.partialorder %v1056, 8.507059e+37
    %v1058 = vand.u32 %v1046, 2147483648
    %v1059 = vor.u32 1.1754944e-38, %v1058
    %v1060 = vsel %vm1057, %v1059, %v1055
    %v1061 = vmul.f32 %v1043, %v1060
    %1063 = vset.pattern.permute.xlu0 0
    %1064 = vperm.xlu0 %1063, %v1061
    %v1065 = vpop.permute.xlu0 %1064
    %1067 = vst [vmem:[#allocation5] sm:$0xff] %v1065
    // Predicated region
    $region22: #{tpu_custom_call.1} parent=1 // pred_check
      _
    $region23: #{tpu_custom_call.1} parent=1 // pred_check_branch
      %1069 = sbr.rel (0) target = $region25
    $region24: #{tpu_custom_call.1} parent=1 // pred_region
      %1071 = vsyncadd [#allocation4], 0
      %s1073 = sshll.u32 [#allocation5], 4
      %s1074 = int_to_ptr.vmem [resolvable:$true] %s1073
      %s1075 = sshll.u32 %s4, 4
      %s1076 = int_to_ptr.hbm [resolvable:$true] %s1075
      %1078 = dma.vmem_to_hbm [thread:$0]  %s1074, 128, %s1076, [#allocation4]
    $region25: #{tpu_custom_call.1} parent=1 // pred_fallthru
      _
    // Predicated region
    $region26: #{tpu_custom_call.1} parent=1 // pred_check
      _
    $region27: #{tpu_custom_call.1} parent=1 // pred_check_branch
      %1080 = sbr.rel (0) target = $region29
    $region28: #{tpu_custom_call.1} parent=1 // pred_region
      %1082 = dma.done [#allocation4], 128
    $region29: #{tpu_custom_call.1} parent=1 // pred_fallthru
      _
    %1083 = vsyncpa [#allocation3], 1
    %1084 = vsyncpa [#allocation4], 1

</llo_original>
